<compile_context>
chip_gen: v6e
topology: v6e:2x2x1
jax: 0.10.0
libtpu: 0.0.40
codegen_flags: <defaults>
</compile_context>

<pallas_src>
import jax
import jax.numpy as jnp
from jax.experimental import pallas as pl
from jax.experimental.pallas import tpu as pltpu


NEG_SLOPE = 0.01   # F.leaky_relu default
OUT_LANES = 128    # lane-dense output slab width
PCOLS = 128        # lane-dense packed-parameter buffer width


def make_network_kernel(node_dim, manual_dim, h1, h2, h3, row_off):
    (r_wl1, r_wr1, r_wl2, r_wr2, r_w3g, r_w3m,
     r_b1, r_b2, r_b3, r_w4, r_b4) = row_off

    def kernel(a_ref, x_ref, man_ref, sel_ref, p_ref, out_ref):
        a = a_ref[0]        # [CN, CN]  block-diag row-normalized adjacency (this chunk)
        x = x_ref[0]        # [CN, F]   stacked node features
        man = man_ref[0]    # [CB, M]   manual features (one row per graph)
        sel = sel_ref[0]    # [CB, CN]  per-graph mean selector (1/N in own node block)

        # --- static, 8-aligned slices of the packed parameter buffer ---
        wl1 = p_ref[r_wl1:r_wl1 + node_dim, 0:h1]        # [F,  H1]
        wr1 = p_ref[r_wr1:r_wr1 + node_dim, 0:h1]        # [F,  H1]
        wl2 = p_ref[r_wl2:r_wl2 + h1, 0:h2]              # [H1, H2]
        wr2 = p_ref[r_wr2:r_wr2 + h1, 0:h2]              # [H1, H2]
        w3g = p_ref[r_w3g:r_w3g + h2, 0:h3]              # [H2, H3]
        w3m = p_ref[r_w3m:r_w3m + manual_dim, 0:h3]      # [M,  H3]
        b1 = p_ref[r_b1:r_b1 + 1, 0:h1]                  # [1, H1]
        b2 = p_ref[r_b2:r_b2 + 1, 0:h2]                  # [1, H2]
        b3 = p_ref[r_b3:r_b3 + 1, 0:h3]                  # [1, H3]
        w4 = p_ref[r_w4:r_w4 + 1, 0:h3]                  # [1, H3]
        b4 = p_ref[r_b4:r_b4 + 1, 0:1]                   # [1, 1]

        def dot(u, v):
            return jnp.dot(u, v, preferred_element_type=jnp.float32)

        # --- SAGE layer 1: block-diag aggregation + accumulated dots (no concat) ---
        agg1 = dot(a, x)                                 # [CN, F]
        z1 = dot(agg1, wl1) + dot(x, wr1) + b1           # [CN, H1]
        f1 = jnp.maximum(z1, NEG_SLOPE * z1)             # leaky_relu

        # --- SAGE layer 2 ---
        agg2 = dot(a, f1)                                # [CN, H1]
        z2 = dot(agg2, wl2) + dot(f1, wr2) + b2          # [CN, H2]
        f2 = jnp.maximum(z2, NEG_SLOPE * z2)             # leaky_relu

        # --- per-graph mean readout via selector matmul, then head ---
        g = dot(sel, f2)                                 # [CB, H2]  (node means, 1/N in sel)
        z3 = dot(g, w3g) + dot(man, w3m) + b3            # [CB, H3]
        f3 = jnp.maximum(z3, 0.0)                        # relu

        # --- final linear to scalar: VPU mul + small lane reduce ---
        y = jnp.sum(f3 * w4, axis=1, keepdims=True) + b4  # [CB, 1]

        # lane-dense (CB, 128) unmasked store; wrapper slices lane 0 back out
        out_ref[0] = jnp.broadcast_to(y, (y.shape[0], OUT_LANES))

    return kernel


def network_forward(a_blk, x, manual, sel, params_buf, row_off, dims):
    """Chunked-batch forward.

    a_blk  [C, CN, CN]  block-diag row-normalized adjacency per chunk
    x      [C, CN, F]   stacked node features
    manual [C, CB, M]   manual features (CB graphs per chunk)
    sel    [C, CB, CN]  per-graph mean selector
    returns [C*CB, 1]   one scalar per graph (torch output shape (1,) per graph)
    """
    node_dim, manual_dim, h1, h2, h3 = dims
    C, CN, _ = a_blk.shape
    _, CB, _ = manual.shape
    prows, pcols = params_buf.shape
    kernel = make_network_kernel(node_dim, manual_dim, h1, h2, h3, row_off)

    out = pl.pallas_call(
        kernel,
        grid=(C,),
        in_specs=[
            pl.BlockSpec((1, CN, CN), lambda c: (c, 0, 0)),          # A chunk
            pl.BlockSpec((1, CN, node_dim), lambda c: (c, 0, 0)),    # X chunk
            pl.BlockSpec((1, CB, manual_dim), lambda c: (c, 0, 0)),  # manual chunk
            pl.BlockSpec((1, CB, CN), lambda c: (c, 0, 0)),          # mean selector chunk
            pl.BlockSpec((prows, pcols), lambda c: (0, 0)),          # packed params (resident)
        ],
        out_specs=pl.BlockSpec((1, CB, OUT_LANES), lambda c: (c, 0, 0)),
        out_shape=jax.ShapeDtypeStruct((C, CB, OUT_LANES), jnp.float32),
        compiler_params=pltpu.CompilerParams(dimension_semantics=("parallel",)),
    )(a_blk, x, manual, sel, params_buf)
    return out[:, :, 0].reshape(-1, 1)   # [C*CB, 1]


def build_norm_adjacency(edge_index, num_nodes):
    """Dense row-normalized adjacency for mean aggregation (messages src -> dst)."""
    src, dst = edge_index[0], edge_index[1]
    a = jnp.zeros((num_nodes, num_nodes), jnp.float32).at[dst, src].add(1.0)
    deg = jnp.sum(a, axis=1, keepdims=True)
    return jnp.where(deg > 0, a / jnp.maximum(deg, 1.0), 0.0)
    # TODO(synk): for large / very sparse graphs replace dense A@X with scalar-prefetch
    # edge-list gather-accumulate (dense MXU MACs on zeros grow as N^2).


def blockdiag_batch(a_graphs, num_chunks):
    """[B, N, N] per-graph adjacency -> [C, CB*N, CB*N] block-diagonal per chunk."""
    B, N, _ = a_graphs.shape
    cb = B // num_chunks
    cn = cb * N
    out = jnp.zeros((num_chunks, cn, cn), jnp.float32)
    for c in range(num_chunks):
        for i in range(cb):
            out = out.at[c, i * N:(i + 1) * N, i * N:(i + 1) * N].set(a_graphs[c * cb + i])
    return out


def mean_selector(batch, n_nodes, num_chunks):
    """[C, CB, CB*N] selector: row b has 1/N over graph b's node block (per-graph mean)."""
    cb = batch // num_chunks
    cn = cb * n_nodes
    s = jnp.zeros((num_chunks, cb, cn), jnp.float32)
    for c in range(num_chunks):
        for i in range(cb):
            s = s.at[c, i, i * n_nodes:(i + 1) * n_nodes].set(1.0 / n_nodes)
    return s


def init_raw_params(key, node_dim, manual_dim, h1, h2, h3):
    """Torch-style raw parameters (SAGEConv: lin_l has bias, lin_r has none)."""
    ks = jax.random.split(key, 10)

    def u(k, shape, fan_in):
        bound = 1.0 / jnp.sqrt(fan_in)
        return jax.random.uniform(k, shape, jnp.float32, -bound, bound)

    return dict(
        wl1=u(ks[0], (h1, node_dim), node_dim),
        wr1=u(ks[1], (h1, node_dim), node_dim),
        b1=u(ks[2], (h1,), node_dim),
        wl2=u(ks[3], (h2, h1), h1),
        wr2=u(ks[4], (h2, h1), h1),
        b2=u(ks[5], (h2,), h1),
        w3=u(ks[6], (h3, h2 + manual_dim), h2 + manual_dim),
        b3=u(ks[7], (h3,), h2 + manual_dim),
        w4=u(ks[8], (1, h3), h3),
        b4=u(ks[9], (1,), h3),
    )


def pack_params(raw, node_dim, manual_dim, h1, h2, h3):
    """Pack all weights (transposed to [in, out]) and biases into one (PROWS, 128) f32
    buffer with every section 8-row aligned (plain vreg loads, no sublane shuffles)."""
    def a8(r):
        return (r + 7) // 8 * 8

    r_wl1 = 0
    r_wr1 = a8(r_wl1 + node_dim)
    r_wl2 = a8(r_wr1 + node_dim)
    r_wr2 = a8(r_wl2 + h1)
    r_w3g = a8(r_wr2 + h1)
    r_w3m = a8(r_w3g + h2)
    r_b1 = a8(r_w3m + manual_dim)
    r_b2 = r_b1 + 8
    r_b3 = r_b2 + 8
    r_w4 = r_b3 + 8
    r_b4 = r_w4 + 8
    prows = a8(r_b4 + 1)

    buf = jnp.zeros((prows, PCOLS), jnp.float32)

    def put(b, r, mat):
        return b.at[r:r + mat.shape[0], :mat.shape[1]].set(mat)

    buf = put(buf, r_wl1, raw["wl1"].T)                 # [F,  H1]
    buf = put(buf, r_wr1, raw["wr1"].T)                 # [F,  H1]
    buf = put(buf, r_wl2, raw["wl2"].T)                 # [H1, H2]
    buf = put(buf, r_wr2, raw["wr2"].T)                 # [H1, H2]
    buf = put(buf, r_w3g, raw["w3"][:, :h2].T)          # [H2, H3]  (no 1/N folding)
    buf = put(buf, r_w3m, raw["w3"][:, h2:].T)          # [M,  H3]
    buf = put(buf, r_b1, raw["b1"][None, :])
    buf = put(buf, r_b2, raw["b2"][None, :])
    buf = put(buf, r_b3, raw["b3"][None, :])
    buf = put(buf, r_w4, raw["w4"])
    buf = put(buf, r_b4, raw["b4"][None, :])

    row_off = (r_wl1, r_wr1, r_wl2, r_wr2, r_w3g, r_w3m, r_b1, r_b2, r_b3, r_w4, r_b4)
    return buf, row_off


if __name__ == "__main__":
    # Small, forward-consistent sizes; whole batch processed in one grid step.
    B = 8                     # graphs per call
    N = 16                    # nodes per graph  -> B*N = 128 stacked node rows
    E = 48                    # edges per graph
    node_feature_dim = 8
    manual_feature_dim = 4
    hidden_layer1_size = 32
    hidden_layer2_size = 32
    graph_embedding_size = hidden_layer2_size   # mean over nodes of layer-2 output
    hidden_layer3_size = 32
    NUM_CHUNKS = 1            # set to 2 on v7x to split the batch across both TensorCores

    key = jax.random.PRNGKey(0)
    k_x, k_e, k_m, k_p = jax.random.split(key, 4)

    x = jax.random.normal(k_x, (B, N, node_feature_dim), jnp.float32)
    edge_index = jax.random.randint(k_e, (B, 2, E), 0, N, jnp.int32)
    manual = jax.random.normal(k_m, (B, manual_feature_dim), jnp.float32)

    a_graphs = jnp.stack([build_norm_adjacency(edge_index[b], N) for b in range(B)])

    raw = init_raw_params(k_p, node_feature_dim, manual_feature_dim,
                          hidden_layer1_size, hidden_layer2_size, hidden_layer3_size)
    params_buf, row_off = pack_params(raw, node_feature_dim, manual_feature_dim,
                                      hidden_layer1_size, hidden_layer2_size,
                                      hidden_layer3_size)

    # Chunked, block-diagonal batch layout.
    CB = B // NUM_CHUNKS
    a_blk = blockdiag_batch(a_graphs, NUM_CHUNKS)                          # [C, CN, CN]
    sel = mean_selector(B, N, NUM_CHUNKS)                                  # [C, CB, CN]
    x_chunked = x.reshape(NUM_CHUNKS, CB * N, node_feature_dim)            # [C, CN, F]
    man_chunked = manual.reshape(NUM_CHUNKS, CB, manual_feature_dim)       # [C, CB, M]

    dims = (node_feature_dim, manual_feature_dim,
            hidden_layer1_size, hidden_layer2_size, hidden_layer3_size)
    y = network_forward(a_blk, x_chunked, man_chunked, sel, params_buf, row_off, dims)
    jax.block_until_ready(y)

    # Pure-JAX reference using the raw (unfused, untransposed) parameters.
    def lrelu(v):
        return jnp.where(v > 0, v, NEG_SLOPE * v)

    def ref_one(a_b, x_b, m_b):
        h1v = lrelu((a_b @ x_b) @ raw["wl1"].T + x_b @ raw["wr1"].T + raw["b1"][None, :])
        h2v = lrelu((a_b @ h1v) @ raw["wl2"].T + h1v @ raw["wr2"].T + raw["b2"][None, :])
        g = jnp.mean(h2v, axis=0, keepdims=True)
        z = jnp.concatenate([g, m_b[None, :]], axis=1)
        h3v = jnp.maximum(z @ raw["w3"].T + raw["b3"][None, :], 0.0)
        return h3v @ raw["w4"].T + raw["b4"][None, :]   # [1, 1]

    y_ref = jnp.concatenate([ref_one(a_graphs[b], x[b], manual[b]) for b in range(B)],
                            axis=0)
    assert jnp.allclose(y, y_ref, atol=1e-4, rtol=1e-4), (y, y_ref)

    print("KERNEL_OK")
</pallas_src>

<mosaic_0001>
module attributes {stable_mosaic.version = 11 : i64} {
  func.func @kernel(%arg0: i32, %arg1: memref<1x128x128xf32, #tpu.memory_space<vmem>>, %arg2: memref<1x128x8xf32, #tpu.memory_space<vmem>>, %arg3: memref<1x8x4xf32, #tpu.memory_space<vmem>>, %arg4: memref<1x8x128xf32, #tpu.memory_space<vmem>>, %arg5: memref<160x128xf32, #tpu.memory_space<vmem>>, %arg6: memref<1x8x128xf32, #tpu.memory_space<vmem>>) attributes {dimension_semantics = [#tpu.dimension_semantics<parallel>], iteration_bounds = array<i64: 1>, scalar_prefetch = 0 : i64, scratch_operands = 0 : i64, tpu.core_type = #tpu.core_type<tc>, window_params = [{transform_indices = @transform_0, window_bounds = array<i64: 1, 128, 128>}, {transform_indices = @transform_1, window_bounds = array<i64: 1, 128, 8>}, {transform_indices = @transform_2, window_bounds = array<i64: 1, 8, 4>}, {transform_indices = @transform_3, window_bounds = array<i64: 1, 8, 128>}, {pipeline_mode = #tpu.pipeline_mode<synchronous>, transform_indices = @transform_4, window_bounds = array<i64: 160, 128>}, {transform_indices = @transform_5, window_bounds = array<i64: 1, 8, 128>}]} {
    %c0 = arith.constant 0 : index
    %c0_0 = arith.constant 0 : index
    %c0_1 = arith.constant 0 : index
    %0 = vector.load %arg1[%c0, %c0_0, %c0_1] : memref<1x128x128xf32, #tpu.memory_space<vmem>>, vector<1x128x128xf32>
    %1 = vector.shape_cast %0 : vector<1x128x128xf32> to vector<128x128xf32>
    %c0_2 = arith.constant 0 : index
    %c0_3 = arith.constant 0 : index
    %c0_4 = arith.constant 0 : index
    %2 = vector.load %arg2[%c0_2, %c0_3, %c0_4] : memref<1x128x8xf32, #tpu.memory_space<vmem>>, vector<1x128x8xf32>
    %3 = vector.shape_cast %2 : vector<1x128x8xf32> to vector<128x8xf32>
    %c0_5 = arith.constant 0 : index
    %c0_6 = arith.constant 0 : index
    %c0_7 = arith.constant 0 : index
    %4 = vector.load %arg3[%c0_5, %c0_6, %c0_7] : memref<1x8x4xf32, #tpu.memory_space<vmem>>, vector<1x8x4xf32>
    %5 = vector.shape_cast %4 : vector<1x8x4xf32> to vector<8x4xf32>
    %c0_8 = arith.constant 0 : index
    %c0_9 = arith.constant 0 : index
    %c0_10 = arith.constant 0 : index
    %6 = vector.load %arg4[%c0_8, %c0_9, %c0_10] : memref<1x8x128xf32, #tpu.memory_space<vmem>>, vector<1x8x128xf32>
    %7 = vector.shape_cast %6 : vector<1x8x128xf32> to vector<8x128xf32>
    %c0_11 = arith.constant 0 : index
    %c0_12 = arith.constant 0 : index
    %8 = vector.load %arg5[%c0_11, %c0_12] : memref<160x128xf32, #tpu.memory_space<vmem>>, vector<8x32xf32>
    %c8 = arith.constant 8 : index
    %c0_13 = arith.constant 0 : index
    %9 = vector.load %arg5[%c8, %c0_13] : memref<160x128xf32, #tpu.memory_space<vmem>>, vector<8x32xf32>
    %c16 = arith.constant 16 : index
    %c0_14 = arith.constant 0 : index
    %10 = vector.load %arg5[%c16, %c0_14] : memref<160x128xf32, #tpu.memory_space<vmem>>, vector<32x32xf32>
    %c48 = arith.constant 48 : index
    %c0_15 = arith.constant 0 : index
    %11 = vector.load %arg5[%c48, %c0_15] : memref<160x128xf32, #tpu.memory_space<vmem>>, vector<32x32xf32>
    %c80 = arith.constant 80 : index
    %c0_16 = arith.constant 0 : index
    %12 = vector.load %arg5[%c80, %c0_16] : memref<160x128xf32, #tpu.memory_space<vmem>>, vector<32x32xf32>
    %c112 = arith.constant 112 : index
    %c0_17 = arith.constant 0 : index
    %13 = vector.load %arg5[%c112, %c0_17] : memref<160x128xf32, #tpu.memory_space<vmem>>, vector<4x32xf32>
    %c120 = arith.constant 120 : index
    %c0_18 = arith.constant 0 : index
    %14 = vector.load %arg5[%c120, %c0_18] : memref<160x128xf32, #tpu.memory_space<vmem>>, vector<1x32xf32>
    %c128 = arith.constant 128 : index
    %c0_19 = arith.constant 0 : index
    %15 = vector.load %arg5[%c128, %c0_19] : memref<160x128xf32, #tpu.memory_space<vmem>>, vector<1x32xf32>
    %c136 = arith.constant 136 : index
    %c0_20 = arith.constant 0 : index
    %16 = vector.load %arg5[%c136, %c0_20] : memref<160x128xf32, #tpu.memory_space<vmem>>, vector<1x32xf32>
    %c144 = arith.constant 144 : index
    %c0_21 = arith.constant 0 : index
    %17 = vector.load %arg5[%c144, %c0_21] : memref<160x128xf32, #tpu.memory_space<vmem>>, vector<1x32xf32>
    %c152 = arith.constant 152 : index
    %c0_22 = arith.constant 0 : index
    %18 = vector.load %arg5[%c152, %c0_22] : memref<160x128xf32, #tpu.memory_space<vmem>>, vector<1x1xf32>
    %cst = arith.constant dense<0.000000e+00> : vector<128x8xf32>
    %19 = tpu.matmul %1, %3, %cst {dimension_numbers = #tpu.dot_dimension_numbers<[1], [0], [0], [1], [0, 0, 1, 1], [], []>} : vector<128x128xf32>, vector<128x8xf32>, vector<128x8xf32> -> vector<128x8xf32>
    %cst_23 = arith.constant dense<0.000000e+00> : vector<128x32xf32>
    %20 = tpu.matmul %19, %8, %cst_23 {dimension_numbers = #tpu.dot_dimension_numbers<[1], [0], [0], [1], [0, 0, 1, 1], [], []>} : vector<128x8xf32>, vector<8x32xf32>, vector<128x32xf32> -> vector<128x32xf32>
    %cst_24 = arith.constant dense<0.000000e+00> : vector<128x32xf32>
    %21 = tpu.matmul %3, %9, %cst_24 {dimension_numbers = #tpu.dot_dimension_numbers<[1], [0], [0], [1], [0, 0, 1, 1], [], []>} : vector<128x8xf32>, vector<8x32xf32>, vector<128x32xf32> -> vector<128x32xf32>
    %22 = arith.addf %20, %21 : vector<128x32xf32>
    %23 = vector.broadcast %14 : vector<1x32xf32> to vector<128x32xf32>
    %24 = arith.addf %22, %23 : vector<128x32xf32>
    %cst_25 = arith.constant 0.00999999977 : f32
    %25 = vector.broadcast %cst_25 : f32 to vector<128x32xf32>
    %26 = arith.mulf %25, %24 : vector<128x32xf32>
    %27 = arith.maximumf %24, %26 : vector<128x32xf32>
    %cst_26 = arith.constant dense<0.000000e+00> : vector<128x32xf32>
    %28 = tpu.matmul %1, %27, %cst_26 {dimension_numbers = #tpu.dot_dimension_numbers<[1], [0], [0], [1], [0, 0, 1, 1], [], []>} : vector<128x128xf32>, vector<128x32xf32>, vector<128x32xf32> -> vector<128x32xf32>
    %cst_27 = arith.constant dense<0.000000e+00> : vector<128x32xf32>
    %29 = tpu.matmul %28, %10, %cst_27 {dimension_numbers = #tpu.dot_dimension_numbers<[1], [0], [0], [1], [0, 0, 1, 1], [], []>} : vector<128x32xf32>, vector<32x32xf32>, vector<128x32xf32> -> vector<128x32xf32>
    %cst_28 = arith.constant dense<0.000000e+00> : vector<128x32xf32>
    %30 = tpu.matmul %27, %11, %cst_28 {dimension_numbers = #tpu.dot_dimension_numbers<[1], [0], [0], [1], [0, 0, 1, 1], [], []>} : vector<128x32xf32>, vector<32x32xf32>, vector<128x32xf32> -> vector<128x32xf32>
    %31 = arith.addf %29, %30 : vector<128x32xf32>
    %32 = vector.broadcast %15 : vector<1x32xf32> to vector<128x32xf32>
    %33 = arith.addf %31, %32 : vector<128x32xf32>
    %cst_29 = arith.constant 0.00999999977 : f32
    %34 = vector.broadcast %cst_29 : f32 to vector<128x32xf32>
    %35 = arith.mulf %34, %33 : vector<128x32xf32>
    %36 = arith.maximumf %33, %35 : vector<128x32xf32>
    %cst_30 = arith.constant dense<0.000000e+00> : vector<8x32xf32>
    %37 = tpu.matmul %7, %36, %cst_30 {dimension_numbers = #tpu.dot_dimension_numbers<[1], [0], [0], [1], [0, 0, 1, 1], [], []>} : vector<8x128xf32>, vector<128x32xf32>, vector<8x32xf32> -> vector<8x32xf32>
    %cst_31 = arith.constant dense<0.000000e+00> : vector<8x32xf32>
    %38 = tpu.matmul %37, %12, %cst_31 {dimension_numbers = #tpu.dot_dimension_numbers<[1], [0], [0], [1], [0, 0, 1, 1], [], []>} : vector<8x32xf32>, vector<32x32xf32>, vector<8x32xf32> -> vector<8x32xf32>
    %cst_32 = arith.constant dense<0.000000e+00> : vector<8x32xf32>
    %39 = tpu.matmul %5, %13, %cst_32 {dimension_numbers = #tpu.dot_dimension_numbers<[1], [0], [0], [1], [0, 0, 1, 1], [], []>} : vector<8x4xf32>, vector<4x32xf32>, vector<8x32xf32> -> vector<8x32xf32>
    %40 = arith.addf %38, %39 : vector<8x32xf32>
    %41 = vector.broadcast %16 : vector<1x32xf32> to vector<8x32xf32>
    %42 = arith.addf %40, %41 : vector<8x32xf32>
    %cst_33 = arith.constant 0.000000e+00 : f32
    %43 = vector.broadcast %cst_33 : f32 to vector<8x32xf32>
    %44 = arith.maximumf %42, %43 : vector<8x32xf32>
    %45 = vector.broadcast %17 : vector<1x32xf32> to vector<8x32xf32>
    %46 = arith.mulf %44, %45 : vector<8x32xf32>
    %cst_34 = arith.constant dense<0.000000e+00> : vector<8xf32>
    %47 = vector.multi_reduction <add>, %46, %cst_34 [1] : vector<8x32xf32> to vector<8xf32>
    %48 = vector.shape_cast %47 : vector<8xf32> to vector<8x1xf32>
    %49 = vector.broadcast %18 : vector<1x1xf32> to vector<8x1xf32>
    %50 = arith.addf %48, %49 : vector<8x1xf32>
    %51 = vector.shape_cast %50 : vector<8x1xf32> to vector<8x1xf32>
    %52 = vector.broadcast %51 : vector<8x1xf32> to vector<8x128xf32>
    %c0_35 = arith.constant 0 : index
    %c0_36 = arith.constant 0 : index
    %c0_37 = arith.constant 0 : index
    %53 = vector.load %arg6[%c0_35, %c0_36, %c0_37] : memref<1x8x128xf32, #tpu.memory_space<vmem>>, vector<1x8x128xf32>
    %54 = vector.shape_cast %53 : vector<1x8x128xf32> to vector<8x128xf32>
    %55 = vector.shape_cast %52 : vector<8x128xf32> to vector<1x8x128xf32>
    tpu.vector_store %arg6[%c0_35, %c0_36, %c0_37], %55 {strides = array<i32>} : memref<1x8x128xf32, #tpu.memory_space<vmem>>, vector<1x8x128xf32>,
    return
  }
  func.func @transform_0(%arg0: i32) -> (i32, i32, i32) {
    %c0_i32 = arith.constant 0 : i32
    %c0_i32_0 = arith.constant 0 : i32
    %c0_i32_1 = arith.constant 0 : i32
    return %arg0, %c0_i32, %c0_i32_0 : i32, i32, i32
  }
  func.func @transform_1(%arg0: i32) -> (i32, i32, i32) {
    %c0_i32 = arith.constant 0 : i32
    %c0_i32_0 = arith.constant 0 : i32
    %c0_i32_1 = arith.constant 0 : i32
    return %arg0, %c0_i32, %c0_i32_0 : i32, i32, i32
  }
  func.func @transform_2(%arg0: i32) -> (i32, i32, i32) {
    %c0_i32 = arith.constant 0 : i32
    %c0_i32_0 = arith.constant 0 : i32
    %c0_i32_1 = arith.constant 0 : i32
    return %arg0, %c0_i32, %c0_i32_0 : i32, i32, i32
  }
  func.func @transform_3(%arg0: i32) -> (i32, i32, i32) {
    %c0_i32 = arith.constant 0 : i32
    %c0_i32_0 = arith.constant 0 : i32
    %c0_i32_1 = arith.constant 0 : i32
    return %arg0, %c0_i32, %c0_i32_0 : i32, i32, i32
  }
  func.func @transform_4(%arg0: i32) -> (i32, i32) {
    %c0_i32 = arith.constant 0 : i32
    %c0_i32_0 = arith.constant 0 : i32
    %c0_i32_1 = arith.constant 0 : i32
    return %c0_i32, %c0_i32_0 : i32, i32
  }
  func.func @transform_5(%arg0: i32) -> (i32, i32, i32) {
    %c0_i32 = arith.constant 0 : i32
    %c0_i32_0 = arith.constant 0 : i32
    %c0_i32_1 = arith.constant 0 : i32
    return %arg0, %c0_i32, %c0_i32_0 : i32, i32, i32
  }
}

</mosaic_0001>

<llo_original>
// kernel: tpu_custom_call.1
$region0: #{tpu_custom_call.1}
  #allocation0 [shape = 'u32[]', space=smem, size = 0x4, offset = 0x4, fixed_abs, tag = 'smem constant byte address 0x4 - core index']
  #allocation1 [shape = 'u32[144,128]{1,0:T(1,128)}', space=vmem, size = 0x12000, scoped, tag = 'internal scratch']
  %s0 = inlined_call_operand.vmem [shape: f32[1,128,128], index: 0, kind: input, shape index: {}]
  %s1 = inlined_call_operand.vmem [shape: f32[1,128,8], index: 1, kind: input, shape index: {}]
  %s2 = inlined_call_operand.vmem [shape: f32[1,8,4], index: 2, kind: input, shape index: {}]
  %s3 = inlined_call_operand.vmem [shape: f32[1,8,128], index: 3, kind: input, shape index: {}]
  %s4 = inlined_call_operand.hbm [shape: f32[160,128], index: 4, kind: input, shape index: {}]
  %s5 = inlined_call_operand.hbm [shape: f32[1,8,128], index: 5, kind: output, shape index: {}]
  %s6 = sld [smem:[#allocation0]]
  $region34: #{tpu_custom_call.1} parent=0
    _
  %s8 = ssub.s32 1, %s6
  %s9 = scalar_select 0, %s8, %s6
  $region1: #{tpu_custom_call.1} parent=0
    #allocation2 [shape = 'u8[81920]{0}', space=vmem, size = 0x14000, scoped, tag = 'input window, operand 4, single buffered']
    #allocation3 [shape = 's32[1]{0}', space=sflag, size = 0x4, scoped, tag = 'scoped memory for tpu_custom_call.1']
    #allocation4 [shape = 's32[1]{0}', space=sflag, size = 0x4, scoped, tag = 'scoped memory for tpu_custom_call.1']
    #allocation5 [shape = 'u8[4096]{0}', space=vmem, size = 0x1000, scoped, tag = 'output window, operand 0, single buffered']
    %10 = vsyncpa [#allocation3], 0
    %11 = vsyncpa [#allocation4], 0
    // Predicated region
    $region2: #{tpu_custom_call.1} parent=1 // pred_check
      _
    $region3: #{tpu_custom_call.1} parent=1 // pred_check_branch
      %13 = sbr.rel (0) target = $region5
    $region4: #{tpu_custom_call.1} parent=1 // pred_region
      _
    $region5: #{tpu_custom_call.1} parent=1 // pred_fallthru
      _
    // Predicated region
    $region6: #{tpu_custom_call.1} parent=1 // pred_check
      _
    $region7: #{tpu_custom_call.1} parent=1 // pred_check_branch
      %15 = sbr.rel (0) target = $region9
    $region8: #{tpu_custom_call.1} parent=1 // pred_region
      _
    $region9: #{tpu_custom_call.1} parent=1 // pred_fallthru
      _
    // Predicated region
    $region10: #{tpu_custom_call.1} parent=1 // pred_check
      _
    $region11: #{tpu_custom_call.1} parent=1 // pred_check_branch
      %17 = sbr.rel (0) target = $region13
    $region12: #{tpu_custom_call.1} parent=1 // pred_region
      _
    $region13: #{tpu_custom_call.1} parent=1 // pred_fallthru
      _
    // Predicated region
    $region14: #{tpu_custom_call.1} parent=1 // pred_check
      _
    $region15: #{tpu_custom_call.1} parent=1 // pred_check_branch
      %19 = sbr.rel (0) target = $region17
    $region16: #{tpu_custom_call.1} parent=1 // pred_region
      _
    $region17: #{tpu_custom_call.1} parent=1 // pred_fallthru
      _
    // Predicated region
    $region18: #{tpu_custom_call.1} parent=1 // pred_check
      _
    $region19: #{tpu_custom_call.1} parent=1 // pred_check_branch
      %21 = sbr.rel (0) target = $region21
    $region20: #{tpu_custom_call.1} parent=1 // pred_region
      %s23 = ssub.s32 2560, 2560
      %24 = vsyncadd [#allocation3], %s23
      %s25 = sshll.u32 [#allocation2], 4
      %s26 = int_to_ptr.vmem [resolvable:$true] %s25
      %31 = dma.hbm_to_vmem [thread:$0]  %s4, 2560, %s26, [#allocation3], 128, 128, 8
    $region21: #{tpu_custom_call.1} parent=1 // pred_fallthru
      _
    // Predicated region
    $region22: #{tpu_custom_call.1} parent=1 // pred_check
      _
    $region23: #{tpu_custom_call.1} parent=1 // pred_check_branch
      %33 = sbr.rel (0) target = $region25
    $region24: #{tpu_custom_call.1} parent=1 // pred_region
      %34 = dma.done [#allocation3], 2560
    $region25: #{tpu_custom_call.1} parent=1 // pred_fallthru
      _
    %v35 = vld [vmem:[%s0] sm:$0xff]
    %v36 = vld [vmem:[%s0 + $0x8] sm:$0xff]
    %v37 = vld [vmem:[%s0 + $0x10] sm:$0xff]
    %v38 = vld [vmem:[%s0 + $0x18] sm:$0xff]
    %v39 = vld [vmem:[%s0 + $0x20] sm:$0xff]
    %v40 = vld [vmem:[%s0 + $0x28] sm:$0xff]
    %v41 = vld [vmem:[%s0 + $0x30] sm:$0xff]
    %v42 = vld [vmem:[%s0 + $0x38] sm:$0xff]
    %v43 = vld [vmem:[%s0 + $0x40] sm:$0xff]
    %v44 = vld [vmem:[%s0 + $0x48] sm:$0xff]
    %v45 = vld [vmem:[%s0 + $0x50] sm:$0xff]
    %v46 = vld [vmem:[%s0 + $0x58] sm:$0xff]
    %v47 = vld [vmem:[%s0 + $0x60] sm:$0xff]
    %v48 = vld [vmem:[%s0 + $0x68] sm:$0xff]
    %v49 = vld [vmem:[%s0 + $0x70] sm:$0xff]
    %v50 = vld [vmem:[%s0 + $0x78] sm:$0xff]
    %v51 = vld [vmem:[%s1] sm:$0xff]
    %v52 = vld [vmem:[%s1 + $0x8] sm:$0xff]
    %v53 = vld [vmem:[%s1 + $0x10] sm:$0xff]
    %v54 = vld [vmem:[%s1 + $0x18] sm:$0xff]
    %v55 = vld [vmem:[%s1 + $0x20] sm:$0xff]
    %v56 = vld [vmem:[%s1 + $0x28] sm:$0xff]
    %v57 = vld [vmem:[%s1 + $0x30] sm:$0xff]
    %v58 = vld [vmem:[%s1 + $0x38] sm:$0xff]
    %v59 = vld [vmem:[%s1 + $0x40] sm:$0xff]
    %v60 = vld [vmem:[%s1 + $0x48] sm:$0xff]
    %v61 = vld [vmem:[%s1 + $0x50] sm:$0xff]
    %v62 = vld [vmem:[%s1 + $0x58] sm:$0xff]
    %v63 = vld [vmem:[%s1 + $0x60] sm:$0xff]
    %v64 = vld [vmem:[%s1 + $0x68] sm:$0xff]
    %v65 = vld [vmem:[%s1 + $0x70] sm:$0xff]
    %v66 = vld [vmem:[%s1 + $0x78] sm:$0xff]
    %v67 = vld [vmem:[%s2] sm:$0xff]
    %v68 = vld [vmem:[%s3] sm:$0xff]
    %v69 = vld [vmem:[#allocation2] sm:$0xff]
    %v70 = vld [vmem:[#allocation2 + $0x8] sm:$0xff]
    %v71 = vld [vmem:[#allocation2 + $0x10] sm:$0xff]
    %v72 = vld [vmem:[#allocation2 + $0x18] sm:$0xff]
    %v73 = vld [vmem:[#allocation2 + $0x20] sm:$0xff]
    %v74 = vld [vmem:[#allocation2 + $0x28] sm:$0xff]
    %v75 = vld [vmem:[#allocation2 + $0x30] sm:$0xff]
    %v76 = vld [vmem:[#allocation2 + $0x38] sm:$0xff]
    %v77 = vld [vmem:[#allocation2 + $0x40] sm:$0xff]
    %v78 = vld [vmem:[#allocation2 + $0x48] sm:$0xff]
    %v79 = vld [vmem:[#allocation2 + $0x50] sm:$0xff]
    %v80 = vld [vmem:[#allocation2 + $0x58] sm:$0xff]
    %v81 = vld [vmem:[#allocation2 + $0x60] sm:$0xff]
    %v82 = vld [vmem:[#allocation2 + $0x68] sm:$0xff]
    %v83 = vld [vmem:[#allocation2 + $0x70] sm:$0xf]
    %v84 = vld [vmem:[#allocation2 + $0x78] sm:$0x1]
    %v85 = vld [vmem:[#allocation2 + $0x80] sm:$0x1]
    %v86 = vld [vmem:[#allocation2 + $0x88] sm:$0x1]
    %v87 = vld [vmem:[#allocation2 + $0x90] sm:$0x1]
    %v88 = vld [vmem:[#allocation2 + $0x98] sm:$0x1]
    %89 = vmatprep.subr.mxu0 0.0
    %90 = vmatpush1.msra.mxu0 %v66
    %91 = vmatprep.subr.mxu0 0.0
    %92 = vmatpush1.msra.mxu0 %v65
    %93 = vmatprep.subr.mxu0 0.0
    %94 = vmatpush1.msra.mxu0 %v64
    %95 = vmatprep.subr.mxu0 0.0
    %96 = vmatpush1.msra.mxu0 %v63
    %97 = vmatprep.subr.mxu0 0.0
    %98 = vmatpush1.msra.mxu0 %v62
    %99 = vmatprep.subr.mxu0 0.0
    %100 = vmatpush1.msra.mxu0 %v61
    %101 = vmatprep.subr.mxu0 0.0
    %102 = vmatpush1.msra.mxu0 %v60
    %103 = vmatprep.subr.mxu0 0.0
    %104 = vmatpush1.msra.mxu0 %v59
    %105 = vmatprep.subr.mxu0 0.0
    %106 = vmatpush1.msra.mxu0 %v58
    %107 = vmatprep.subr.mxu0 0.0
    %108 = vmatpush1.msra.mxu0 %v57
    %109 = vmatprep.subr.mxu0 0.0
    %110 = vmatpush1.msra.mxu0 %v56
    %111 = vmatprep.subr.mxu0 0.0
    %112 = vmatpush1.msra.mxu0 %v55
    %113 = vmatprep.subr.mxu0 0.0
    %114 = vmatpush1.msra.mxu0 %v54
    %115 = vmatprep.subr.mxu0 0.0
    %116 = vmatpush1.msra.mxu0 %v53
    %117 = vmatprep.subr.mxu0 0.0
    %118 = vmatpush1.msra.mxu0 %v52
    %119 = vmatprep.subr.mxu0 0.0
    %120 = vmatpush1.msra.mxu0 %v51
    %121 = vmatprep.subr.mxu0 0.0
    %122 = vmatpush2.msra.mxu0 0.0
    %123 = vmatprep.subr.mxu0 0.0
    %124 = vmatpush2.msra.mxu0 0.0
    %125 = vmatprep.subr.mxu0 0.0
    %126 = vmatpush2.msra.mxu0 0.0
    %127 = vmatprep.subr.mxu0 0.0
    %128 = vmatpush2.msra.mxu0 0.0
    %129 = vmatprep.subr.mxu0 0.0
    %130 = vmatpush2.msra.mxu0 0.0
    %131 = vmatprep.subr.mxu0 0.0
    %132 = vmatpush2.msra.mxu0 0.0
    %133 = vmatprep.subr.mxu0 0.0
    %134 = vmatpush2.msra.mxu0 0.0
    %135 = vmatprep.subr.mxu0 0.0
    %136 = vmatpush2.msra.mxu0 0.0
    %137 = vmatprep.subr.mxu0 0.0
    %138 = vmatpush2.msra.mxu0 0.0
    %139 = vmatprep.subr.mxu0 0.0
    %140 = vmatpush2.msra.mxu0 0.0
    %141 = vmatprep.subr.mxu0 0.0
    %142 = vmatpush2.msra.mxu0 0.0
    %143 = vmatprep.subr.mxu0 0.0
    %144 = vmatpush2.msra.mxu0 0.0
    %145 = vmatprep.subr.mxu0 0.0
    %146 = vmatpush2.msra.mxu0 0.0
    %147 = vmatprep.subr.mxu0 0.0
    %148 = vmatpush2.msra.mxu0 0.0
    %149 = vmatprep.subr.mxu0 0.0
    %150 = vmatpush2.msra.mxu0 0.0
    %151 = vmatprep.subr.mxu0 0.0
    %152 = vmatpush2.msra.mxu0 0.0
    %153 = vmatprep.mubr.f32.mxu0 0.0
    %154 = vmatmul.mubr.f32.gmra.mxu0 %v35
    %v155 = vpop.f32.mrf.mxu0
    %v156 = vadd.f32 0.0, %v155
    %v157 = vpop.f32.mrf.mxu0
    %158 = vmatprep.mubr.f32.mxu0 0.0
    %159 = vmatmul.mubr.f32.gmra.mxu0 %v36
    %v160 = vpop.f32.mrf.mxu0
    %v161 = vadd.f32 0.0, %v160
    %v162 = vpop.f32.mrf.mxu0
    %163 = vmatprep.mubr.f32.mxu0 0.0
    %164 = vmatmul.mubr.f32.gmra.mxu0 %v37
    %v165 = vpop.f32.mrf.mxu0
    %v166 = vadd.f32 0.0, %v165
    %v167 = vpop.f32.mrf.mxu0
    %168 = vmatprep.mubr.f32.mxu0 0.0
    %169 = vmatmul.mubr.f32.gmra.mxu0 %v38
    %v170 = vpop.f32.mrf.mxu0
    %v171 = vadd.f32 0.0, %v170
    %v172 = vpop.f32.mrf.mxu0
    %173 = vmatprep.mubr.f32.mxu0 0.0
    %174 = vmatmul.mubr.f32.gmra.mxu0 %v39
    %v175 = vpop.f32.mrf.mxu0
    %v176 = vadd.f32 0.0, %v175
    %v177 = vpop.f32.mrf.mxu0
    %178 = vmatprep.mubr.f32.mxu0 0.0
    %179 = vmatmul.mubr.f32.gmra.mxu0 %v40
    %v180 = vpop.f32.mrf.mxu0
    %v181 = vadd.f32 0.0, %v180
    %v182 = vpop.f32.mrf.mxu0
    %183 = vmatprep.mubr.f32.mxu0 0.0
    %184 = vmatmul.mubr.f32.gmra.mxu0 %v41
    %v185 = vpop.f32.mrf.mxu0
    %v186 = vadd.f32 0.0, %v185
    %v187 = vpop.f32.mrf.mxu0
    %188 = vmatprep.mubr.f32.mxu0 0.0
    %189 = vmatmul.mubr.f32.gmra.mxu0 %v42
    %v190 = vpop.f32.mrf.mxu0
    %v191 = vadd.f32 0.0, %v190
    %v192 = vpop.f32.mrf.mxu0
    %193 = vmatprep.mubr.f32.mxu0 0.0
    %194 = vmatmul.mubr.f32.gmra.mxu0 %v43
    %v195 = vpop.f32.mrf.mxu0
    %v196 = vadd.f32 0.0, %v195
    %v197 = vpop.f32.mrf.mxu0
    %198 = vmatprep.mubr.f32.mxu0 0.0
    %199 = vmatmul.mubr.f32.gmra.mxu0 %v44
    %v200 = vpop.f32.mrf.mxu0
    %v201 = vadd.f32 0.0, %v200
    %v202 = vpop.f32.mrf.mxu0
    %203 = vmatprep.mubr.f32.mxu0 0.0
    %204 = vmatmul.mubr.f32.gmra.mxu0 %v45
    %v205 = vpop.f32.mrf.mxu0
    %v206 = vadd.f32 0.0, %v205
    %v207 = vpop.f32.mrf.mxu0
    %208 = vmatprep.mubr.f32.mxu0 0.0
    %209 = vmatmul.mubr.f32.gmra.mxu0 %v46
    %v210 = vpop.f32.mrf.mxu0
    %v211 = vadd.f32 0.0, %v210
    %v212 = vpop.f32.mrf.mxu0
    %213 = vmatprep.mubr.f32.mxu0 0.0
    %214 = vmatmul.mubr.f32.gmra.mxu0 %v47
    %v215 = vpop.f32.mrf.mxu0
    %v216 = vadd.f32 0.0, %v215
    %v217 = vpop.f32.mrf.mxu0
    %218 = vmatprep.mubr.f32.mxu0 0.0
    %219 = vmatmul.mubr.f32.gmra.mxu0 %v48
    %v220 = vpop.f32.mrf.mxu0
    %v221 = vadd.f32 0.0, %v220
    %v222 = vpop.f32.mrf.mxu0
    %223 = vmatprep.mubr.f32.mxu0 0.0
    %224 = vmatmul.mubr.f32.gmra.mxu0 %v49
    %v225 = vpop.f32.mrf.mxu0
    %v226 = vadd.f32 0.0, %v225
    %v227 = vpop.f32.mrf.mxu0
    %228 = vmatprep.mubr.f32.mxu0 0.0
    %229 = vmatmul.mubr.f32.gmra.mxu0 %v50
    %v230 = vpop.f32.mrf.mxu0
    %v231 = vadd.f32 0.0, %v230
    %v232 = vpop.f32.mrf.mxu0
    %233 = vdwg.mxu0
    %vm234 = vcmask 64512
    %v236 = vsel %vm234, %v51, 0
    %v239 = vsel %vm234, %v52, 0
    %v242 = vsel %vm234, %v53, 0
    %v245 = vsel %vm234, %v54, 0
    %v248 = vsel %vm234, %v55, 0
    %v251 = vsel %vm234, %v56, 0
    %v254 = vsel %vm234, %v57, 0
    %v257 = vsel %vm234, %v58, 0
    %v260 = vsel %vm234, %v59, 0
    %v263 = vsel %vm234, %v60, 0
    %v266 = vsel %vm234, %v61, 0
    %v269 = vsel %vm234, %v62, 0
    %v272 = vsel %vm234, %v63, 0
    %v275 = vsel %vm234, %v64, 0
    %v278 = vsel %vm234, %v65, 0
    %v281 = vsel %vm234, %v66, 0
    %283 = vmatprep.subr.mxu0 0.0
    %284 = vmatpush1.msra.mxu0 0.0
    %285 = vmatprep.subr.mxu0 0.0
    %286 = vmatpush1.msra.mxu0 0.0
    %287 = vmatprep.subr.mxu0 0.0
    %288 = vmatpush1.msra.mxu0 0.0
    %289 = vmatprep.subr.mxu0 0.0
    %290 = vmatpush1.msra.mxu0 0.0
    %291 = vmatprep.subr.mxu0 0.0
    %292 = vmatpush1.msra.mxu0 0.0
    %293 = vmatprep.subr.mxu0 0.0
    %294 = vmatpush1.msra.mxu0 0.0
    %295 = vmatprep.subr.mxu0 0.0
    %296 = vmatpush1.msra.mxu0 0.0
    %297 = vmatprep.subr.mxu0 0.0
    %298 = vmatpush1.msra.mxu0 0.0
    %299 = vmatprep.subr.mxu0 0.0
    %300 = vmatpush1.msra.mxu0 0.0
    %301 = vmatprep.subr.mxu0 0.0
    %302 = vmatpush1.msra.mxu0 0.0
    %303 = vmatprep.subr.mxu0 0.0
    %304 = vmatpush1.msra.mxu0 0.0
    %305 = vmatprep.subr.mxu0 0.0
    %306 = vmatpush1.msra.mxu0 0.0
    %307 = vmatprep.subr.mxu0 0.0
    %308 = vmatpush1.msra.mxu0 0.0
    %309 = vmatprep.subr.mxu0 0.0
    %310 = vmatpush1.msra.mxu0 0.0
    %311 = vmatprep.subr.mxu0 0.0
    %312 = vmatpush1.msra.mxu0 0.0
    %313 = vmatprep.subr.mxu0 0.0
    %314 = vmatpush1.msra.mxu0 %v70
    %315 = vmatprep.subr.mxu0 0.0
    %316 = vmatpush2.msra.mxu0 0.0
    %317 = vmatprep.subr.mxu0 0.0
    %318 = vmatpush2.msra.mxu0 0.0
    %319 = vmatprep.subr.mxu0 0.0
    %320 = vmatpush2.msra.mxu0 0.0
    %321 = vmatprep.subr.mxu0 0.0
    %322 = vmatpush2.msra.mxu0 0.0
    %323 = vmatprep.subr.mxu0 0.0
    %324 = vmatpush2.msra.mxu0 0.0
    %325 = vmatprep.subr.mxu0 0.0
    %326 = vmatpush2.msra.mxu0 0.0
    %327 = vmatprep.subr.mxu0 0.0
    %328 = vmatpush2.msra.mxu0 0.0
    %329 = vmatprep.subr.mxu0 0.0
    %330 = vmatpush2.msra.mxu0 0.0
    %331 = vmatprep.subr.mxu0 0.0
    %332 = vmatpush2.msra.mxu0 0.0
    %333 = vmatprep.subr.mxu0 0.0
    %334 = vmatpush2.msra.mxu0 0.0
    %335 = vmatprep.subr.mxu0 0.0
    %336 = vmatpush2.msra.mxu0 0.0
    %337 = vmatprep.subr.mxu0 0.0
    %338 = vmatpush2.msra.mxu0 0.0
    %339 = vmatprep.subr.mxu0 0.0
    %340 = vmatpush2.msra.mxu0 0.0
    %341 = vmatprep.subr.mxu0 0.0
    %342 = vmatpush2.msra.mxu0 0.0
    %343 = vmatprep.subr.mxu0 0.0
    %344 = vmatpush2.msra.mxu0 0.0
    %345 = vmatprep.subr.mxu0 0.0
    %346 = vmatpush2.msra.mxu0 0.0
    %347 = vmatprep.mubr.f32.mxu0 0.0
    %348 = vmatmul.mubr.f32.gmra.mxu0 %v236
    %v349 = vpop.f32.mrf.mxu0
    %v350 = vadd.f32 0.0, %v349
    %v351 = vpop.f32.mrf.mxu0
    %352 = vmatprep.mubr.f32.mxu0 0.0
    %353 = vmatmul.mubr.f32.gmra.mxu0 %v239
    %v354 = vpop.f32.mrf.mxu0
    %v355 = vadd.f32 0.0, %v354
    %v356 = vpop.f32.mrf.mxu0
    %357 = vmatprep.mubr.f32.mxu0 0.0
    %358 = vmatmul.mubr.f32.gmra.mxu0 %v242
    %v359 = vpop.f32.mrf.mxu0
    %v360 = vadd.f32 0.0, %v359
    %v361 = vpop.f32.mrf.mxu0
    %362 = vmatprep.mubr.f32.mxu0 0.0
    %363 = vmatmul.mubr.f32.gmra.mxu0 %v245
    %v364 = vpop.f32.mrf.mxu0
    %v365 = vadd.f32 0.0, %v364
    %v366 = vpop.f32.mrf.mxu0
    %367 = vmatprep.mubr.f32.mxu0 0.0
    %368 = vmatmul.mubr.f32.gmra.mxu0 %v248
    %v369 = vpop.f32.mrf.mxu0
    %v370 = vadd.f32 0.0, %v369
    %v371 = vpop.f32.mrf.mxu0
    %372 = vmatprep.mubr.f32.mxu0 0.0
    %373 = vmatmul.mubr.f32.gmra.mxu0 %v251
    %v374 = vpop.f32.mrf.mxu0
    %v375 = vadd.f32 0.0, %v374
    %v376 = vpop.f32.mrf.mxu0
    %377 = vmatprep.mubr.f32.mxu0 0.0
    %378 = vmatmul.mubr.f32.gmra.mxu0 %v254
    %v379 = vpop.f32.mrf.mxu0
    %v380 = vadd.f32 0.0, %v379
    %v381 = vpop.f32.mrf.mxu0
    %382 = vmatprep.mubr.f32.mxu0 0.0
    %383 = vmatmul.mubr.f32.gmra.mxu0 %v257
    %v384 = vpop.f32.mrf.mxu0
    %v385 = vadd.f32 0.0, %v384
    %v386 = vpop.f32.mrf.mxu0
    %387 = vmatprep.mubr.f32.mxu0 0.0
    %388 = vmatmul.mubr.f32.gmra.mxu0 %v260
    %v389 = vpop.f32.mrf.mxu0
    %v390 = vadd.f32 0.0, %v389
    %v391 = vpop.f32.mrf.mxu0
    %392 = vmatprep.mubr.f32.mxu0 0.0
    %393 = vmatmul.mubr.f32.gmra.mxu0 %v263
    %v394 = vpop.f32.mrf.mxu0
    %v395 = vadd.f32 0.0, %v394
    %v396 = vpop.f32.mrf.mxu0
    %397 = vmatprep.mubr.f32.mxu0 0.0
    %398 = vmatmul.mubr.f32.gmra.mxu0 %v266
    %v399 = vpop.f32.mrf.mxu0
    %v400 = vadd.f32 0.0, %v399
    %v401 = vpop.f32.mrf.mxu0
    %402 = vmatprep.mubr.f32.mxu0 0.0
    %403 = vmatmul.mubr.f32.gmra.mxu0 %v269
    %v404 = vpop.f32.mrf.mxu0
    %v405 = vadd.f32 0.0, %v404
    %v406 = vpop.f32.mrf.mxu0
    %407 = vmatprep.mubr.f32.mxu0 0.0
    %408 = vmatmul.mubr.f32.gmra.mxu0 %v272
    %v409 = vpop.f32.mrf.mxu0
    %v410 = vadd.f32 0.0, %v409
    %v411 = vpop.f32.mrf.mxu0
    %412 = vmatprep.mubr.f32.mxu0 0.0
    %413 = vmatmul.mubr.f32.gmra.mxu0 %v275
    %v414 = vpop.f32.mrf.mxu0
    %v415 = vadd.f32 0.0, %v414
    %v416 = vpop.f32.mrf.mxu0
    %417 = vmatprep.mubr.f32.mxu0 0.0
    %418 = vmatmul.mubr.f32.gmra.mxu0 %v278
    %v419 = vpop.f32.mrf.mxu0
    %v420 = vadd.f32 0.0, %v419
    %v421 = vpop.f32.mrf.mxu0
    %422 = vmatprep.mubr.f32.mxu0 0.0
    %423 = vmatmul.mubr.f32.gmra.mxu0 %v281
    %v424 = vpop.f32.mrf.mxu0
    %v425 = vadd.f32 0.0, %v424
    %v426 = vpop.f32.mrf.mxu0
    %427 = vdwg.mxu0
    %v429 = vsel %vm234, %v156, 0
    %v432 = vsel %vm234, %v161, 0
    %v435 = vsel %vm234, %v166, 0
    %v438 = vsel %vm234, %v171, 0
    %v441 = vsel %vm234, %v176, 0
    %v444 = vsel %vm234, %v181, 0
    %v447 = vsel %vm234, %v186, 0
    %v450 = vsel %vm234, %v191, 0
    %v453 = vsel %vm234, %v196, 0
    %v456 = vsel %vm234, %v201, 0
    %v459 = vsel %vm234, %v206, 0
    %v462 = vsel %vm234, %v211, 0
    %v465 = vsel %vm234, %v216, 0
    %v468 = vsel %vm234, %v221, 0
    %v471 = vsel %vm234, %v226, 0
    %v474 = vsel %vm234, %v231, 0
    %476 = vmatprep.subr.mxu0 0.0
    %477 = vmatpush1.msra.mxu0 0.0
    %478 = vmatprep.subr.mxu0 0.0
    %479 = vmatpush1.msra.mxu0 0.0
    %480 = vmatprep.subr.mxu0 0.0
    %481 = vmatpush1.msra.mxu0 0.0
    %482 = vmatprep.subr.mxu0 0.0
    %483 = vmatpush1.msra.mxu0 0.0
    %484 = vmatprep.subr.mxu0 0.0
    %485 = vmatpush1.msra.mxu0 0.0
    %486 = vmatprep.subr.mxu0 0.0
    %487 = vmatpush1.msra.mxu0 0.0
    %488 = vmatprep.subr.mxu0 0.0
    %489 = vmatpush1.msra.mxu0 0.0
    %490 = vmatprep.subr.mxu0 0.0
    %491 = vmatpush1.msra.mxu0 0.0
    %492 = vmatprep.subr.mxu0 0.0
    %493 = vmatpush1.msra.mxu0 0.0
    %494 = vmatprep.subr.mxu0 0.0
    %495 = vmatpush1.msra.mxu0 0.0
    %496 = vmatprep.subr.mxu0 0.0
    %497 = vmatpush1.msra.mxu0 0.0
    %498 = vmatprep.subr.mxu0 0.0
    %499 = vmatpush1.msra.mxu0 0.0
    %500 = vmatprep.subr.mxu0 0.0
    %501 = vmatpush1.msra.mxu0 0.0
    %502 = vmatprep.subr.mxu0 0.0
    %503 = vmatpush1.msra.mxu0 0.0
    %504 = vmatprep.subr.mxu0 0.0
    %505 = vmatpush1.msra.mxu0 0.0
    %506 = vmatprep.subr.mxu0 0.0
    %507 = vmatpush1.msra.mxu0 %v69
    %508 = vmatprep.subr.mxu0 0.0
    %509 = vmatpush2.msra.mxu0 0.0
    %510 = vmatprep.subr.mxu0 0.0
    %511 = vmatpush2.msra.mxu0 0.0
    %512 = vmatprep.subr.mxu0 0.0
    %513 = vmatpush2.msra.mxu0 0.0
    %514 = vmatprep.subr.mxu0 0.0
    %515 = vmatpush2.msra.mxu0 0.0
    %516 = vmatprep.subr.mxu0 0.0
    %517 = vmatpush2.msra.mxu0 0.0
    %518 = vmatprep.subr.mxu0 0.0
    %519 = vmatpush2.msra.mxu0 0.0
    %520 = vmatprep.subr.mxu0 0.0
    %521 = vmatpush2.msra.mxu0 0.0
    %522 = vmatprep.subr.mxu0 0.0
    %523 = vmatpush2.msra.mxu0 0.0
    %524 = vmatprep.subr.mxu0 0.0
    %525 = vmatpush2.msra.mxu0 0.0
    %526 = vmatprep.subr.mxu0 0.0
    %527 = vmatpush2.msra.mxu0 0.0
    %528 = vmatprep.subr.mxu0 0.0
    %529 = vmatpush2.msra.mxu0 0.0
    %530 = vmatprep.subr.mxu0 0.0
    %531 = vmatpush2.msra.mxu0 0.0
    %532 = vmatprep.subr.mxu0 0.0
    %533 = vmatpush2.msra.mxu0 0.0
    %534 = vmatprep.subr.mxu0 0.0
    %535 = vmatpush2.msra.mxu0 0.0
    %536 = vmatprep.subr.mxu0 0.0
    %537 = vmatpush2.msra.mxu0 0.0
    %538 = vmatprep.subr.mxu0 0.0
    %539 = vmatpush2.msra.mxu0 0.0
    %540 = vmatprep.mubr.f32.mxu0 0.0
    %541 = vmatmul.mubr.f32.gmra.mxu0 %v429
    %v542 = vpop.f32.mrf.mxu0
    %v543 = vadd.f32 %v350, %v542
    %v544 = vpop.f32.mrf.mxu0
    %545 = vmatprep.mubr.f32.mxu0 0.0
    %546 = vmatmul.mubr.f32.gmra.mxu0 %v432
    %v547 = vpop.f32.mrf.mxu0
    %v548 = vadd.f32 %v355, %v547
    %v549 = vpop.f32.mrf.mxu0
    %550 = vmatprep.mubr.f32.mxu0 0.0
    %551 = vmatmul.mubr.f32.gmra.mxu0 %v435
    %v552 = vpop.f32.mrf.mxu0
    %v553 = vadd.f32 %v360, %v552
    %v554 = vpop.f32.mrf.mxu0
    %555 = vmatprep.mubr.f32.mxu0 0.0
    %556 = vmatmul.mubr.f32.gmra.mxu0 %v438
    %v557 = vpop.f32.mrf.mxu0
    %v558 = vadd.f32 %v365, %v557
    %v559 = vpop.f32.mrf.mxu0
    %560 = vmatprep.mubr.f32.mxu0 0.0
    %561 = vmatmul.mubr.f32.gmra.mxu0 %v441
    %v562 = vpop.f32.mrf.mxu0
    %v563 = vadd.f32 %v370, %v562
    %v564 = vpop.f32.mrf.mxu0
    %565 = vmatprep.mubr.f32.mxu0 0.0
    %566 = vmatmul.mubr.f32.gmra.mxu0 %v444
    %v567 = vpop.f32.mrf.mxu0
    %v568 = vadd.f32 %v375, %v567
    %v569 = vpop.f32.mrf.mxu0
    %570 = vmatprep.mubr.f32.mxu0 0.0
    %571 = vmatmul.mubr.f32.gmra.mxu0 %v447
    %v572 = vpop.f32.mrf.mxu0
    %v573 = vadd.f32 %v380, %v572
    %v574 = vpop.f32.mrf.mxu0
    %575 = vmatprep.mubr.f32.mxu0 0.0
    %576 = vmatmul.mubr.f32.gmra.mxu0 %v450
    %v577 = vpop.f32.mrf.mxu0
    %v578 = vadd.f32 %v385, %v577
    %v579 = vpop.f32.mrf.mxu0
    %580 = vmatprep.mubr.f32.mxu0 0.0
    %581 = vmatmul.mubr.f32.gmra.mxu0 %v453
    %v582 = vpop.f32.mrf.mxu0
    %v583 = vadd.f32 %v390, %v582
    %v584 = vpop.f32.mrf.mxu0
    %585 = vmatprep.mubr.f32.mxu0 0.0
    %586 = vmatmul.mubr.f32.gmra.mxu0 %v456
    %v587 = vpop.f32.mrf.mxu0
    %v588 = vadd.f32 %v395, %v587
    %v589 = vpop.f32.mrf.mxu0
    %590 = vmatprep.mubr.f32.mxu0 0.0
    %591 = vmatmul.mubr.f32.gmra.mxu0 %v459
    %v592 = vpop.f32.mrf.mxu0
    %v593 = vadd.f32 %v400, %v592
    %v594 = vpop.f32.mrf.mxu0
    %595 = vmatprep.mubr.f32.mxu0 0.0
    %596 = vmatmul.mubr.f32.gmra.mxu0 %v462
    %v597 = vpop.f32.mrf.mxu0
    %v598 = vadd.f32 %v405, %v597
    %v599 = vpop.f32.mrf.mxu0
    %600 = vmatprep.mubr.f32.mxu0 0.0
    %601 = vmatmul.mubr.f32.gmra.mxu0 %v465
    %v602 = vpop.f32.mrf.mxu0
    %v603 = vadd.f32 %v410, %v602
    %v604 = vpop.f32.mrf.mxu0
    %605 = vmatprep.mubr.f32.mxu0 0.0
    %606 = vmatmul.mubr.f32.gmra.mxu0 %v468
    %v607 = vpop.f32.mrf.mxu0
    %v608 = vadd.f32 %v415, %v607
    %v609 = vpop.f32.mrf.mxu0
    %610 = vmatprep.mubr.f32.mxu0 0.0
    %611 = vmatmul.mubr.f32.gmra.mxu0 %v471
    %v612 = vpop.f32.mrf.mxu0
    %v613 = vadd.f32 %v420, %v612
    %v614 = vpop.f32.mrf.mxu0
    %615 = vmatprep.mubr.f32.mxu0 0.0
    %616 = vmatmul.mubr.f32.gmra.mxu0 %v474
    %v617 = vpop.f32.mrf.mxu0
    %v618 = vadd.f32 %v425, %v617
    %v619 = vpop.f32.mrf.mxu0
    %620 = vdwg.mxu0
    %v621 = vlaneseq
    %v622 = vshrl.u32 %v621, 7
    %v623 = vsub.s32 0, %v622
    %v624 = vrot.slane %v84, %v623
    %v625 = vadd.f32 %v543, %v624
    %v626 = vadd.f32 %v548, %v624
    %v627 = vadd.f32 %v553, %v624
    %v628 = vadd.f32 %v558, %v624
    %v629 = vadd.f32 %v563, %v624
    %v630 = vadd.f32 %v568, %v624
    %v631 = vadd.f32 %v573, %v624
    %v632 = vadd.f32 %v578, %v624
    %v633 = vadd.f32 %v583, %v624
    %v634 = vadd.f32 %v588, %v624
    %v635 = vadd.f32 %v593, %v624
    %v636 = vadd.f32 %v598, %v624
    %v637 = vadd.f32 %v603, %v624
    %v638 = vadd.f32 %v608, %v624
    %v639 = vadd.f32 %v613, %v624
    %v640 = vadd.f32 %v618, %v624
    %v641 = vmul.f32 %v625, 0.01
    %v642 = vmul.f32 %v626, 0.01
    %v643 = vmul.f32 %v627, 0.01
    %v644 = vmul.f32 %v628, 0.01
    %v645 = vmul.f32 %v629, 0.01
    %v646 = vmul.f32 %v630, 0.01
    %v647 = vmul.f32 %v631, 0.01
    %v648 = vmul.f32 %v632, 0.01
    %v649 = vmul.f32 %v633, 0.01
    %v650 = vmul.f32 %v634, 0.01
    %v651 = vmul.f32 %v635, 0.01
    %v652 = vmul.f32 %v636, 0.01
    %v653 = vmul.f32 %v637, 0.01
    %v654 = vmul.f32 %v638, 0.01
    %v655 = vmul.f32 %v639, 0.01
    %v656 = vmul.f32 %v640, 0.01
    %v657 = vmax.f32 %v625, %v641
    %v658 = vmax.f32 %v626, %v642
    %v659 = vmax.f32 %v627, %v643
    %v660 = vmax.f32 %v628, %v644
    %v661 = vmax.f32 %v629, %v645
    %v662 = vmax.f32 %v630, %v646
    %v663 = vmax.f32 %v631, %v647
    %v664 = vmax.f32 %v632, %v648
    %v665 = vmax.f32 %v633, %v649
    %v666 = vmax.f32 %v634, %v650
    %v667 = vmax.f32 %v635, %v651
    %v668 = vmax.f32 %v636, %v652
    %v669 = vmax.f32 %v637, %v653
    %v670 = vmax.f32 %v638, %v654
    %v671 = vmax.f32 %v639, %v655
    %v672 = vmax.f32 %v640, %v656
    %673 = vmatprep.subr.mxu0 0.0
    %674 = vmatpush1.msra.mxu0 %v672
    %675 = vmatprep.subr.mxu0 0.0
    %676 = vmatpush1.msra.mxu0 %v671
    %677 = vmatprep.subr.mxu0 0.0
    %678 = vmatpush1.msra.mxu0 %v670
    %679 = vmatprep.subr.mxu0 0.0
    %680 = vmatpush1.msra.mxu0 %v669
    %681 = vmatprep.subr.mxu0 0.0
    %682 = vmatpush1.msra.mxu0 %v668
    %683 = vmatprep.subr.mxu0 0.0
    %684 = vmatpush1.msra.mxu0 %v667
    %685 = vmatprep.subr.mxu0 0.0
    %686 = vmatpush1.msra.mxu0 %v666
    %687 = vmatprep.subr.mxu0 0.0
    %688 = vmatpush1.msra.mxu0 %v665
    %689 = vmatprep.subr.mxu0 0.0
    %690 = vmatpush1.msra.mxu0 %v664
    %691 = vmatprep.subr.mxu0 0.0
    %692 = vmatpush1.msra.mxu0 %v663
    %693 = vmatprep.subr.mxu0 0.0
    %694 = vmatpush1.msra.mxu0 %v662
    %695 = vmatprep.subr.mxu0 0.0
    %696 = vmatpush1.msra.mxu0 %v661
    %697 = vmatprep.subr.mxu0 0.0
    %698 = vmatpush1.msra.mxu0 %v660
    %699 = vmatprep.subr.mxu0 0.0
    %700 = vmatpush1.msra.mxu0 %v659
    %701 = vmatprep.subr.mxu0 0.0
    %702 = vmatpush1.msra.mxu0 %v658
    %703 = vmatprep.subr.mxu0 0.0
    %704 = vmatpush1.msra.mxu0 %v657
    %705 = vmatprep.subr.mxu0 0.0
    %706 = vmatpush2.msra.mxu0 0.0
    %707 = vmatprep.subr.mxu0 0.0
    %708 = vmatpush2.msra.mxu0 0.0
    %709 = vmatprep.subr.mxu0 0.0
    %710 = vmatpush2.msra.mxu0 0.0
    %711 = vmatprep.subr.mxu0 0.0
    %712 = vmatpush2.msra.mxu0 0.0
    %713 = vmatprep.subr.mxu0 0.0
    %714 = vmatpush2.msra.mxu0 0.0
    %715 = vmatprep.subr.mxu0 0.0
    %716 = vmatpush2.msra.mxu0 0.0
    %717 = vmatprep.subr.mxu0 0.0
    %718 = vmatpush2.msra.mxu0 0.0
    %719 = vmatprep.subr.mxu0 0.0
    %720 = vmatpush2.msra.mxu0 0.0
    %721 = vmatprep.subr.mxu0 0.0
    %722 = vmatpush2.msra.mxu0 0.0
    %723 = vmatprep.subr.mxu0 0.0
    %724 = vmatpush2.msra.mxu0 0.0
    %725 = vmatprep.subr.mxu0 0.0
    %726 = vmatpush2.msra.mxu0 0.0
    %727 = vmatprep.subr.mxu0 0.0
    %728 = vmatpush2.msra.mxu0 0.0
    %729 = vmatprep.subr.mxu0 0.0
    %730 = vmatpush2.msra.mxu0 0.0
    %731 = vmatprep.subr.mxu0 0.0
    %732 = vmatpush2.msra.mxu0 0.0
    %733 = vmatprep.subr.mxu0 0.0
    %734 = vmatpush2.msra.mxu0 0.0
    %735 = vmatprep.subr.mxu0 0.0
    %736 = vmatpush2.msra.mxu0 0.0
    %737 = vmatprep.mubr.f32.mxu0 0.0
    %738 = vmatmul.mubr.f32.gmra.mxu0 %v35
    %v739 = vpop.f32.mrf.mxu0
    %v740 = vadd.f32 0.0, %v739
    %v741 = vpop.f32.mrf.mxu0
    %742 = vmatprep.mubr.f32.mxu0 0.0
    %743 = vmatmul.mubr.f32.gmra.mxu0 %v36
    %v744 = vpop.f32.mrf.mxu0
    %v745 = vadd.f32 0.0, %v744
    %v746 = vpop.f32.mrf.mxu0
    %747 = vmatprep.mubr.f32.mxu0 0.0
    %748 = vmatmul.mubr.f32.gmra.mxu0 %v37
    %v749 = vpop.f32.mrf.mxu0
    %v750 = vadd.f32 0.0, %v749
    %v751 = vpop.f32.mrf.mxu0
    %752 = vmatprep.mubr.f32.mxu0 0.0
    %753 = vmatmul.mubr.f32.gmra.mxu0 %v38
    %v754 = vpop.f32.mrf.mxu0
    %v755 = vadd.f32 0.0, %v754
    %v756 = vpop.f32.mrf.mxu0
    %757 = vmatprep.mubr.f32.mxu0 0.0
    %758 = vmatmul.mubr.f32.gmra.mxu0 %v39
    %v759 = vpop.f32.mrf.mxu0
    %v760 = vadd.f32 0.0, %v759
    %v761 = vpop.f32.mrf.mxu0
    %762 = vmatprep.mubr.f32.mxu0 0.0
    %763 = vmatmul.mubr.f32.gmra.mxu0 %v40
    %v764 = vpop.f32.mrf.mxu0
    %v765 = vadd.f32 0.0, %v764
    %v766 = vpop.f32.mrf.mxu0
    %767 = vmatprep.mubr.f32.mxu0 0.0
    %768 = vmatmul.mubr.f32.gmra.mxu0 %v41
    %v769 = vpop.f32.mrf.mxu0
    %v770 = vadd.f32 0.0, %v769
    %v771 = vpop.f32.mrf.mxu0
    %772 = vmatprep.mubr.f32.mxu0 0.0
    %773 = vmatmul.mubr.f32.gmra.mxu0 %v42
    %v774 = vpop.f32.mrf.mxu0
    %v775 = vadd.f32 0.0, %v774
    %v776 = vpop.f32.mrf.mxu0
    %777 = vmatprep.mubr.f32.mxu0 0.0
    %778 = vmatmul.mubr.f32.gmra.mxu0 %v43
    %v779 = vpop.f32.mrf.mxu0
    %v780 = vadd.f32 0.0, %v779
    %v781 = vpop.f32.mrf.mxu0
    %782 = vmatprep.mubr.f32.mxu0 0.0
    %783 = vmatmul.mubr.f32.gmra.mxu0 %v44
    %v784 = vpop.f32.mrf.mxu0
    %v785 = vadd.f32 0.0, %v784
    %v786 = vpop.f32.mrf.mxu0
    %787 = vmatprep.mubr.f32.mxu0 0.0
    %788 = vmatmul.mubr.f32.gmra.mxu0 %v45
    %v789 = vpop.f32.mrf.mxu0
    %v790 = vadd.f32 0.0, %v789
    %v791 = vpop.f32.mrf.mxu0
    %792 = vmatprep.mubr.f32.mxu0 0.0
    %793 = vmatmul.mubr.f32.gmra.mxu0 %v46
    %v794 = vpop.f32.mrf.mxu0
    %v795 = vadd.f32 0.0, %v794
    %v796 = vpop.f32.mrf.mxu0
    %797 = vmatprep.mubr.f32.mxu0 0.0
    %798 = vmatmul.mubr.f32.gmra.mxu0 %v47
    %v799 = vpop.f32.mrf.mxu0
    %v800 = vadd.f32 0.0, %v799
    %v801 = vpop.f32.mrf.mxu0
    %802 = vmatprep.mubr.f32.mxu0 0.0
    %803 = vmatmul.mubr.f32.gmra.mxu0 %v48
    %v804 = vpop.f32.mrf.mxu0
    %v805 = vadd.f32 0.0, %v804
    %v806 = vpop.f32.mrf.mxu0
    %807 = vmatprep.mubr.f32.mxu0 0.0
    %808 = vmatmul.mubr.f32.gmra.mxu0 %v49
    %v809 = vpop.f32.mrf.mxu0
    %v810 = vadd.f32 0.0, %v809
    %v811 = vpop.f32.mrf.mxu0
    %812 = vmatprep.mubr.f32.mxu0 0.0
    %813 = vmatmul.mubr.f32.gmra.mxu0 %v50
    %v814 = vpop.f32.mrf.mxu0
    %v815 = vadd.f32 0.0, %v814
    %v816 = vpop.f32.mrf.mxu0
    %817 = vdwg.mxu0
    %vm818 = vcmask 261120
    %v820 = vsel %vm818, %v657, 0
    %v823 = vsel %vm818, %v658, 0
    %v826 = vsel %vm818, %v659, 0
    %v829 = vsel %vm818, %v660, 0
    %v832 = vsel %vm818, %v661, 0
    %v835 = vsel %vm818, %v662, 0
    %v838 = vsel %vm818, %v663, 0
    %v841 = vsel %vm818, %v664, 0
    %v844 = vsel %vm818, %v665, 0
    %v847 = vsel %vm818, %v666, 0
    %v850 = vsel %vm818, %v667, 0
    %v853 = vsel %vm818, %v668, 0
    %v856 = vsel %vm818, %v669, 0
    %v859 = vsel %vm818, %v670, 0
    %v862 = vsel %vm818, %v671, 0
    %v865 = vsel %vm818, %v672, 0
    %867 = vmatprep.subr.mxu0 0.0
    %868 = vmatpush1.msra.mxu0 0.0
    %869 = vmatprep.subr.mxu0 0.0
    %870 = vmatpush1.msra.mxu0 0.0
    %871 = vmatprep.subr.mxu0 0.0
    %872 = vmatpush1.msra.mxu0 0.0
    %873 = vmatprep.subr.mxu0 0.0
    %874 = vmatpush1.msra.mxu0 0.0
    %875 = vmatprep.subr.mxu0 0.0
    %876 = vmatpush1.msra.mxu0 0.0
    %877 = vmatprep.subr.mxu0 0.0
    %878 = vmatpush1.msra.mxu0 0.0
    %879 = vmatprep.subr.mxu0 0.0
    %880 = vmatpush1.msra.mxu0 0.0
    %881 = vmatprep.subr.mxu0 0.0
    %882 = vmatpush1.msra.mxu0 0.0
    %883 = vmatprep.subr.mxu0 0.0
    %884 = vmatpush1.msra.mxu0 0.0
    %885 = vmatprep.subr.mxu0 0.0
    %886 = vmatpush1.msra.mxu0 0.0
    %887 = vmatprep.subr.mxu0 0.0
    %888 = vmatpush1.msra.mxu0 0.0
    %889 = vmatprep.subr.mxu0 0.0
    %890 = vmatpush1.msra.mxu0 0.0
    %891 = vmatprep.subr.mxu0 0.0
    %892 = vmatpush1.msra.mxu0 %v78
    %893 = vmatprep.subr.mxu0 0.0
    %894 = vmatpush1.msra.mxu0 %v77
    %895 = vmatprep.subr.mxu0 0.0
    %896 = vmatpush1.msra.mxu0 %v76
    %897 = vmatprep.subr.mxu0 0.0
    %898 = vmatpush1.msra.mxu0 %v75
    %899 = vmatprep.subr.mxu0 0.0
    %900 = vmatpush2.msra.mxu0 0.0
    %901 = vmatprep.subr.mxu0 0.0
    %902 = vmatpush2.msra.mxu0 0.0
    %903 = vmatprep.subr.mxu0 0.0
    %904 = vmatpush2.msra.mxu0 0.0
    %905 = vmatprep.subr.mxu0 0.0
    %906 = vmatpush2.msra.mxu0 0.0
    %907 = vmatprep.subr.mxu0 0.0
    %908 = vmatpush2.msra.mxu0 0.0
    %909 = vmatprep.subr.mxu0 0.0
    %910 = vmatpush2.msra.mxu0 0.0
    %911 = vmatprep.subr.mxu0 0.0
    %912 = vmatpush2.msra.mxu0 0.0
    %913 = vmatprep.subr.mxu0 0.0
    %914 = vmatpush2.msra.mxu0 0.0
    %915 = vmatprep.subr.mxu0 0.0
    %916 = vmatpush2.msra.mxu0 0.0
    %917 = vmatprep.subr.mxu0 0.0
    %918 = vmatpush2.msra.mxu0 0.0
    %919 = vmatprep.subr.mxu0 0.0
    %920 = vmatpush2.msra.mxu0 0.0
    %921 = vmatprep.subr.mxu0 0.0
    %922 = vmatpush2.msra.mxu0 0.0
    %923 = vmatprep.subr.mxu0 0.0
    %924 = vmatpush2.msra.mxu0 0.0
    %925 = vmatprep.subr.mxu0 0.0
    %926 = vmatpush2.msra.mxu0 0.0
    %927 = vmatprep.subr.mxu0 0.0
    %928 = vmatpush2.msra.mxu0 0.0
    %929 = vmatprep.subr.mxu0 0.0
    %930 = vmatpush2.msra.mxu0 0.0
    %931 = vmatprep.mubr.f32.mxu0 0.0
    %932 = vmatmul.mubr.f32.gmra.mxu0 %v820
    %v933 = vpop.f32.mrf.mxu0
    %v934 = vadd.f32 0.0, %v933
    %v935 = vpop.f32.mrf.mxu0
    %936 = vmatprep.mubr.f32.mxu0 0.0
    %937 = vmatmul.mubr.f32.gmra.mxu0 %v823
    %v938 = vpop.f32.mrf.mxu0
    %v939 = vadd.f32 0.0, %v938
    %v940 = vpop.f32.mrf.mxu0
    %941 = vmatprep.mubr.f32.mxu0 0.0
    %942 = vmatmul.mubr.f32.gmra.mxu0 %v826
    %v943 = vpop.f32.mrf.mxu0
    %v944 = vadd.f32 0.0, %v943
    %v945 = vpop.f32.mrf.mxu0
    %946 = vmatprep.mubr.f32.mxu0 0.0
    %947 = vmatmul.mubr.f32.gmra.mxu0 %v829
    %v948 = vpop.f32.mrf.mxu0
    %v949 = vadd.f32 0.0, %v948
    %v950 = vpop.f32.mrf.mxu0
    %951 = vmatprep.mubr.f32.mxu0 0.0
    %952 = vmatmul.mubr.f32.gmra.mxu0 %v832
    %v953 = vpop.f32.mrf.mxu0
    %v954 = vadd.f32 0.0, %v953
    %v955 = vpop.f32.mrf.mxu0
    %956 = vmatprep.mubr.f32.mxu0 0.0
    %957 = vmatmul.mubr.f32.gmra.mxu0 %v835
    %v958 = vpop.f32.mrf.mxu0
    %v959 = vadd.f32 0.0, %v958
    %v960 = vpop.f32.mrf.mxu0
    %961 = vmatprep.mubr.f32.mxu0 0.0
    %962 = vmatmul.mubr.f32.gmra.mxu0 %v838
    %v963 = vpop.f32.mrf.mxu0
    %v964 = vadd.f32 0.0, %v963
    %v965 = vpop.f32.mrf.mxu0
    %966 = vmatprep.mubr.f32.mxu0 0.0
    %967 = vmatmul.mubr.f32.gmra.mxu0 %v841
    %v968 = vpop.f32.mrf.mxu0
    %v969 = vadd.f32 0.0, %v968
    %v970 = vpop.f32.mrf.mxu0
    %971 = vmatprep.mubr.f32.mxu0 0.0
    %972 = vmatmul.mubr.f32.gmra.mxu0 %v844
    %v973 = vpop.f32.mrf.mxu0
    %v974 = vadd.f32 0.0, %v973
    %v975 = vpop.f32.mrf.mxu0
    %976 = vmatprep.mubr.f32.mxu0 0.0
    %977 = vmatmul.mubr.f32.gmra.mxu0 %v847
    %v978 = vpop.f32.mrf.mxu0
    %v979 = vadd.f32 0.0, %v978
    %v980 = vpop.f32.mrf.mxu0
    %981 = vmatprep.mubr.f32.mxu0 0.0
    %982 = vmatmul.mubr.f32.gmra.mxu0 %v850
    %v983 = vpop.f32.mrf.mxu0
    %v984 = vadd.f32 0.0, %v983
    %v985 = vpop.f32.mrf.mxu0
    %986 = vmatprep.mubr.f32.mxu0 0.0
    %987 = vmatmul.mubr.f32.gmra.mxu0 %v853
    %v988 = vpop.f32.mrf.mxu0
    %v989 = vadd.f32 0.0, %v988
    %v990 = vpop.f32.mrf.mxu0
    %991 = vmatprep.mubr.f32.mxu0 0.0
    %992 = vmatmul.mubr.f32.gmra.mxu0 %v856
    %v993 = vpop.f32.mrf.mxu0
    %v994 = vadd.f32 0.0, %v993
    %v995 = vpop.f32.mrf.mxu0
    %996 = vmatprep.mubr.f32.mxu0 0.0
    %997 = vmatmul.mubr.f32.gmra.mxu0 %v859
    %v998 = vpop.f32.mrf.mxu0
    %v999 = vadd.f32 0.0, %v998
    %v1000 = vpop.f32.mrf.mxu0
    %1001 = vmatprep.mubr.f32.mxu0 0.0
    %1002 = vmatmul.mubr.f32.gmra.mxu0 %v862
    %v1003 = vpop.f32.mrf.mxu0
    %v1004 = vadd.f32 0.0, %v1003
    %v1005 = vpop.f32.mrf.mxu0
    %1006 = vmatprep.mubr.f32.mxu0 0.0
    %1007 = vmatmul.mubr.f32.gmra.mxu0 %v865
    %v1008 = vpop.f32.mrf.mxu0
    %v1009 = vadd.f32 0.0, %v1008
    %v1010 = vpop.f32.mrf.mxu0
    %1011 = vdwg.mxu0
    %v1013 = vsel %vm818, %v740, 0
    %v1016 = vsel %vm818, %v745, 0
    %v1019 = vsel %vm818, %v750, 0
    %v1022 = vsel %vm818, %v755, 0
    %v1025 = vsel %vm818, %v760, 0
    %v1028 = vsel %vm818, %v765, 0
    %v1031 = vsel %vm818, %v770, 0
    %v1034 = vsel %vm818, %v775, 0
    %v1037 = vsel %vm818, %v780, 0
    %v1040 = vsel %vm818, %v785, 0
    %v1043 = vsel %vm818, %v790, 0
    %v1046 = vsel %vm818, %v795, 0
    %v1049 = vsel %vm818, %v800, 0
    %v1052 = vsel %vm818, %v805, 0
    %v1055 = vsel %vm818, %v810, 0
    %v1058 = vsel %vm818, %v815, 0
    %1060 = vmatprep.subr.mxu0 0.0
    %1061 = vmatpush1.msra.mxu0 0.0
    %1062 = vmatprep.subr.mxu0 0.0
    %1063 = vmatpush1.msra.mxu0 0.0
    %1064 = vmatprep.subr.mxu0 0.0
    %1065 = vmatpush1.msra.mxu0 0.0
    %1066 = vmatprep.subr.mxu0 0.0
    %1067 = vmatpush1.msra.mxu0 0.0
    %1068 = vmatprep.subr.mxu0 0.0
    %1069 = vmatpush1.msra.mxu0 0.0
    %1070 = vmatprep.subr.mxu0 0.0
    %1071 = vmatpush1.msra.mxu0 0.0
    %1072 = vmatprep.subr.mxu0 0.0
    %1073 = vmatpush1.msra.mxu0 0.0
    %1074 = vmatprep.subr.mxu0 0.0
    %1075 = vmatpush1.msra.mxu0 0.0
    %1076 = vmatprep.subr.mxu0 0.0
    %1077 = vmatpush1.msra.mxu0 0.0
    %1078 = vmatprep.subr.mxu0 0.0
    %1079 = vmatpush1.msra.mxu0 0.0
    %1080 = vmatprep.subr.mxu0 0.0
    %1081 = vmatpush1.msra.mxu0 0.0
    %1082 = vmatprep.subr.mxu0 0.0
    %1083 = vmatpush1.msra.mxu0 0.0
    %1084 = vmatprep.subr.mxu0 0.0
    %1085 = vmatpush1.msra.mxu0 %v74
    %1086 = vmatprep.subr.mxu0 0.0
    %1087 = vmatpush1.msra.mxu0 %v73
    %1088 = vmatprep.subr.mxu0 0.0
    %1089 = vmatpush1.msra.mxu0 %v72
    %1090 = vmatprep.subr.mxu0 0.0
    %1091 = vmatpush1.msra.mxu0 %v71
    %1092 = vmatprep.subr.mxu0 0.0
    %1093 = vmatpush2.msra.mxu0 0.0
    %1094 = vmatprep.subr.mxu0 0.0
    %1095 = vmatpush2.msra.mxu0 0.0
    %1096 = vmatprep.subr.mxu0 0.0
    %1097 = vmatpush2.msra.mxu0 0.0
    %1098 = vmatprep.subr.mxu0 0.0
    %1099 = vmatpush2.msra.mxu0 0.0
    %1100 = vmatprep.subr.mxu0 0.0
    %1101 = vmatpush2.msra.mxu0 0.0
    %1102 = vmatprep.subr.mxu0 0.0
    %1103 = vmatpush2.msra.mxu0 0.0
    %1104 = vmatprep.subr.mxu0 0.0
    %1105 = vmatpush2.msra.mxu0 0.0
    %1106 = vmatprep.subr.mxu0 0.0
    %1107 = vmatpush2.msra.mxu0 0.0
    %1108 = vmatprep.subr.mxu0 0.0
    %1109 = vmatpush2.msra.mxu0 0.0
    %1110 = vmatprep.subr.mxu0 0.0
    %1111 = vmatpush2.msra.mxu0 0.0
    %1112 = vmatprep.subr.mxu0 0.0
    %1113 = vmatpush2.msra.mxu0 0.0
    %1114 = vmatprep.subr.mxu0 0.0
    %1115 = vmatpush2.msra.mxu0 0.0
    %1116 = vmatprep.subr.mxu0 0.0
    %1117 = vmatpush2.msra.mxu0 0.0
    %1118 = vmatprep.subr.mxu0 0.0
    %1119 = vmatpush2.msra.mxu0 0.0
    %1120 = vmatprep.subr.mxu0 0.0
    %1121 = vmatpush2.msra.mxu0 0.0
    %1122 = vmatprep.subr.mxu0 0.0
    %1123 = vmatpush2.msra.mxu0 0.0
    %1124 = vmatprep.mubr.f32.mxu0 0.0
    %1125 = vmatmul.mubr.f32.gmra.mxu0 %v1013
    %v1126 = vpop.f32.mrf.mxu0
    %v1127 = vadd.f32 %v934, %v1126
    %v1128 = vpop.f32.mrf.mxu0
    %1129 = vmatprep.mubr.f32.mxu0 0.0
    %1130 = vmatmul.mubr.f32.gmra.mxu0 %v1016
    %v1131 = vpop.f32.mrf.mxu0
    %v1132 = vadd.f32 %v939, %v1131
    %v1133 = vpop.f32.mrf.mxu0
    %1134 = vmatprep.mubr.f32.mxu0 0.0
    %1135 = vmatmul.mubr.f32.gmra.mxu0 %v1019
    %v1136 = vpop.f32.mrf.mxu0
    %v1137 = vadd.f32 %v944, %v1136
    %v1138 = vpop.f32.mrf.mxu0
    %1139 = vmatprep.mubr.f32.mxu0 0.0
    %1140 = vmatmul.mubr.f32.gmra.mxu0 %v1022
    %v1141 = vpop.f32.mrf.mxu0
    %v1142 = vadd.f32 %v949, %v1141
    %v1143 = vpop.f32.mrf.mxu0
    %1144 = vmatprep.mubr.f32.mxu0 0.0
    %1145 = vmatmul.mubr.f32.gmra.mxu0 %v1025
    %v1146 = vpop.f32.mrf.mxu0
    %v1147 = vadd.f32 %v954, %v1146
    %v1148 = vpop.f32.mrf.mxu0
    %1149 = vmatprep.mubr.f32.mxu0 0.0
    %1150 = vmatmul.mubr.f32.gmra.mxu0 %v1028
    %v1151 = vpop.f32.mrf.mxu0
    %v1152 = vadd.f32 %v959, %v1151
    %v1153 = vpop.f32.mrf.mxu0
    %1154 = vmatprep.mubr.f32.mxu0 0.0
    %1155 = vmatmul.mubr.f32.gmra.mxu0 %v1031
    %v1156 = vpop.f32.mrf.mxu0
    %v1157 = vadd.f32 %v964, %v1156
    %v1158 = vpop.f32.mrf.mxu0
    %1159 = vmatprep.mubr.f32.mxu0 0.0
    %1160 = vmatmul.mubr.f32.gmra.mxu0 %v1034
    %v1161 = vpop.f32.mrf.mxu0
    %v1162 = vadd.f32 %v969, %v1161
    %v1163 = vpop.f32.mrf.mxu0
    %1164 = vmatprep.mubr.f32.mxu0 0.0
    %1165 = vmatmul.mubr.f32.gmra.mxu0 %v1037
    %v1166 = vpop.f32.mrf.mxu0
    %v1167 = vadd.f32 %v974, %v1166
    %v1168 = vpop.f32.mrf.mxu0
    %1169 = vmatprep.mubr.f32.mxu0 0.0
    %1170 = vmatmul.mubr.f32.gmra.mxu0 %v1040
    %v1171 = vpop.f32.mrf.mxu0
    %v1172 = vadd.f32 %v979, %v1171
    %v1173 = vpop.f32.mrf.mxu0
    %1174 = vmatprep.mubr.f32.mxu0 0.0
    %1175 = vmatmul.mubr.f32.gmra.mxu0 %v1043
    %v1176 = vpop.f32.mrf.mxu0
    %v1177 = vadd.f32 %v984, %v1176
    %v1178 = vpop.f32.mrf.mxu0
    %1179 = vmatprep.mubr.f32.mxu0 0.0
    %1180 = vmatmul.mubr.f32.gmra.mxu0 %v1046
    %v1181 = vpop.f32.mrf.mxu0
    %v1182 = vadd.f32 %v989, %v1181
    %v1183 = vpop.f32.mrf.mxu0
    %1184 = vmatprep.mubr.f32.mxu0 0.0
    %1185 = vmatmul.mubr.f32.gmra.mxu0 %v1049
    %v1186 = vpop.f32.mrf.mxu0
    %v1187 = vadd.f32 %v994, %v1186
    %v1188 = vpop.f32.mrf.mxu0
    %1189 = vmatprep.mubr.f32.mxu0 0.0
    %1190 = vmatmul.mubr.f32.gmra.mxu0 %v1052
    %v1191 = vpop.f32.mrf.mxu0
    %v1192 = vadd.f32 %v999, %v1191
    %v1193 = vpop.f32.mrf.mxu0
    %1194 = vmatprep.mubr.f32.mxu0 0.0
    %1195 = vmatmul.mubr.f32.gmra.mxu0 %v1055
    %v1196 = vpop.f32.mrf.mxu0
    %v1197 = vadd.f32 %v1004, %v1196
    %v1198 = vpop.f32.mrf.mxu0
    %1199 = vmatprep.mubr.f32.mxu0 0.0
    %1200 = vmatmul.mubr.f32.gmra.mxu0 %v1058
    %v1201 = vpop.f32.mrf.mxu0
    %v1202 = vadd.f32 %v1009, %v1201
    %v1203 = vpop.f32.mrf.mxu0
    %1204 = vdwg.mxu0
    %v1205 = vlaneseq
    %v1206 = vshrl.u32 %v1205, 7
    %v1207 = vsub.s32 0, %v1206
    %v1208 = vrot.slane %v85, %v1207
    %v1209 = vadd.f32 %v1127, %v1208
    %v1210 = vadd.f32 %v1132, %v1208
    %v1211 = vadd.f32 %v1137, %v1208
    %v1212 = vadd.f32 %v1142, %v1208
    %v1213 = vadd.f32 %v1147, %v1208
    %v1214 = vadd.f32 %v1152, %v1208
    %v1215 = vadd.f32 %v1157, %v1208
    %v1216 = vadd.f32 %v1162, %v1208
    %v1217 = vadd.f32 %v1167, %v1208
    %v1218 = vadd.f32 %v1172, %v1208
    %v1219 = vadd.f32 %v1177, %v1208
    %v1220 = vadd.f32 %v1182, %v1208
    %v1221 = vadd.f32 %v1187, %v1208
    %v1222 = vadd.f32 %v1192, %v1208
    %v1223 = vadd.f32 %v1197, %v1208
    %v1224 = vadd.f32 %v1202, %v1208
    %v1225 = vmul.f32 %v1209, 0.01
    %v1226 = vmul.f32 %v1210, 0.01
    %v1227 = vmul.f32 %v1211, 0.01
    %v1228 = vmul.f32 %v1212, 0.01
    %v1229 = vmul.f32 %v1213, 0.01
    %v1230 = vmul.f32 %v1214, 0.01
    %v1231 = vmul.f32 %v1215, 0.01
    %v1232 = vmul.f32 %v1216, 0.01
    %v1233 = vmul.f32 %v1217, 0.01
    %v1234 = vmul.f32 %v1218, 0.01
    %v1235 = vmul.f32 %v1219, 0.01
    %v1236 = vmul.f32 %v1220, 0.01
    %v1237 = vmul.f32 %v1221, 0.01
    %v1238 = vmul.f32 %v1222, 0.01
    %v1239 = vmul.f32 %v1223, 0.01
    %v1240 = vmul.f32 %v1224, 0.01
    %v1241 = vmax.f32 %v1209, %v1225
    %v1242 = vmax.f32 %v1210, %v1226
    %v1243 = vmax.f32 %v1211, %v1227
    %v1244 = vmax.f32 %v1212, %v1228
    %v1245 = vmax.f32 %v1213, %v1229
    %v1246 = vmax.f32 %v1214, %v1230
    %v1247 = vmax.f32 %v1215, %v1231
    %v1248 = vmax.f32 %v1216, %v1232
    %v1249 = vmax.f32 %v1217, %v1233
    %v1250 = vmax.f32 %v1218, %v1234
    %v1251 = vmax.f32 %v1219, %v1235
    %v1252 = vmax.f32 %v1220, %v1236
    %v1253 = vmax.f32 %v1221, %v1237
    %v1254 = vmax.f32 %v1222, %v1238
    %v1255 = vmax.f32 %v1223, %v1239
    %v1256 = vmax.f32 %v1224, %v1240
    %1257 = vmatprep.subr.mxu0 0.0
    %1258 = vmatpush1.msra.mxu0 %v1256
    %1259 = vmatprep.subr.mxu0 0.0
    %1260 = vmatpush1.msra.mxu0 %v1255
    %1261 = vmatprep.subr.mxu0 0.0
    %1262 = vmatpush1.msra.mxu0 %v1254
    %1263 = vmatprep.subr.mxu0 0.0
    %1264 = vmatpush1.msra.mxu0 %v1253
    %1265 = vmatprep.subr.mxu0 0.0
    %1266 = vmatpush1.msra.mxu0 %v1252
    %1267 = vmatprep.subr.mxu0 0.0
    %1268 = vmatpush1.msra.mxu0 %v1251
    %1269 = vmatprep.subr.mxu0 0.0
    %1270 = vmatpush1.msra.mxu0 %v1250
    %1271 = vmatprep.subr.mxu0 0.0
    %1272 = vmatpush1.msra.mxu0 %v1249
    %1273 = vmatprep.subr.mxu0 0.0
    %1274 = vmatpush1.msra.mxu0 %v1248
    %1275 = vmatprep.subr.mxu0 0.0
    %1276 = vmatpush1.msra.mxu0 %v1247
    %1277 = vmatprep.subr.mxu0 0.0
    %1278 = vmatpush1.msra.mxu0 %v1246
    %1279 = vmatprep.subr.mxu0 0.0
    %1280 = vmatpush1.msra.mxu0 %v1245
    %1281 = vmatprep.subr.mxu0 0.0
    %1282 = vmatpush1.msra.mxu0 %v1244
    %1283 = vmatprep.subr.mxu0 0.0
    %1284 = vmatpush1.msra.mxu0 %v1243
    %1285 = vmatprep.subr.mxu0 0.0
    %1286 = vmatpush1.msra.mxu0 %v1242
    %1287 = vmatprep.subr.mxu0 0.0
    %1288 = vmatpush1.msra.mxu0 %v1241
    %1289 = vmatprep.subr.mxu0 0.0
    %1290 = vmatpush2.msra.mxu0 0.0
    %1291 = vmatprep.subr.mxu0 0.0
    %1292 = vmatpush2.msra.mxu0 0.0
    %1293 = vmatprep.subr.mxu0 0.0
    %1294 = vmatpush2.msra.mxu0 0.0
    %1295 = vmatprep.subr.mxu0 0.0
    %1296 = vmatpush2.msra.mxu0 0.0
    %1297 = vmatprep.subr.mxu0 0.0
    %1298 = vmatpush2.msra.mxu0 0.0
    %1299 = vmatprep.subr.mxu0 0.0
    %1300 = vmatpush2.msra.mxu0 0.0
    %1301 = vmatprep.subr.mxu0 0.0
    %1302 = vmatpush2.msra.mxu0 0.0
    %1303 = vmatprep.subr.mxu0 0.0
    %1304 = vmatpush2.msra.mxu0 0.0
    %1305 = vmatprep.subr.mxu0 0.0
    %1306 = vmatpush2.msra.mxu0 0.0
    %1307 = vmatprep.subr.mxu0 0.0
    %1308 = vmatpush2.msra.mxu0 0.0
    %1309 = vmatprep.subr.mxu0 0.0
    %1310 = vmatpush2.msra.mxu0 0.0
    %1311 = vmatprep.subr.mxu0 0.0
    %1312 = vmatpush2.msra.mxu0 0.0
    %1313 = vmatprep.subr.mxu0 0.0
    %1314 = vmatpush2.msra.mxu0 0.0
    %1315 = vmatprep.subr.mxu0 0.0
    %1316 = vmatpush2.msra.mxu0 0.0
    %1317 = vmatprep.subr.mxu0 0.0
    %1318 = vmatpush2.msra.mxu0 0.0
    %1319 = vmatprep.subr.mxu0 0.0
    %1320 = vmatpush2.msra.mxu0 0.0
    %1321 = vmatprep.mubr.f32.mxu0 0.0
    %1322 = vmatmul.mubr.f32.gmra.mxu0 %v68
    %v1323 = vpop.f32.mrf.mxu0
    %v1324 = vadd.f32 0.0, %v1323
    %v1325 = vpop.f32.mrf.mxu0
    %1326 = vdwg.mxu0
    %vm1327 = vcmask 31744
    %v1329 = vsel %vm1327, %v67, 0
    %vm1331 = vcmask 1043456
    %v1333 = vsel %vm1331, %v83, 0
    %1335 = vmatprep.subr.mxu0 0.0
    %1336 = vmatpush1.msra.mxu0 0.0
    %1337 = vmatprep.subr.mxu0 0.0
    %1338 = vmatpush1.msra.mxu0 0.0
    %1339 = vmatprep.subr.mxu0 0.0
    %1340 = vmatpush1.msra.mxu0 0.0
    %1341 = vmatprep.subr.mxu0 0.0
    %1342 = vmatpush1.msra.mxu0 0.0
    %1343 = vmatprep.subr.mxu0 0.0
    %1344 = vmatpush1.msra.mxu0 0.0
    %1345 = vmatprep.subr.mxu0 0.0
    %1346 = vmatpush1.msra.mxu0 0.0
    %1347 = vmatprep.subr.mxu0 0.0
    %1348 = vmatpush1.msra.mxu0 0.0
    %1349 = vmatprep.subr.mxu0 0.0
    %1350 = vmatpush1.msra.mxu0 0.0
    %1351 = vmatprep.subr.mxu0 0.0
    %1352 = vmatpush1.msra.mxu0 0.0
    %1353 = vmatprep.subr.mxu0 0.0
    %1354 = vmatpush1.msra.mxu0 0.0
    %1355 = vmatprep.subr.mxu0 0.0
    %1356 = vmatpush1.msra.mxu0 0.0
    %1357 = vmatprep.subr.mxu0 0.0
    %1358 = vmatpush1.msra.mxu0 0.0
    %1359 = vmatprep.subr.mxu0 0.0
    %1360 = vmatpush1.msra.mxu0 0.0
    %1361 = vmatprep.subr.mxu0 0.0
    %1362 = vmatpush1.msra.mxu0 0.0
    %1363 = vmatprep.subr.mxu0 0.0
    %1364 = vmatpush1.msra.mxu0 0.0
    %1365 = vmatprep.subr.mxu0 0.0
    %1366 = vmatpush1.msra.mxu0 %v1333
    %1367 = vmatprep.subr.mxu0 0.0
    %1368 = vmatpush2.msra.mxu0 0.0
    %1369 = vmatprep.subr.mxu0 0.0
    %1370 = vmatpush2.msra.mxu0 0.0
    %1371 = vmatprep.subr.mxu0 0.0
    %1372 = vmatpush2.msra.mxu0 0.0
    %1373 = vmatprep.subr.mxu0 0.0
    %1374 = vmatpush2.msra.mxu0 0.0
    %1375 = vmatprep.subr.mxu0 0.0
    %1376 = vmatpush2.msra.mxu0 0.0
    %1377 = vmatprep.subr.mxu0 0.0
    %1378 = vmatpush2.msra.mxu0 0.0
    %1379 = vmatprep.subr.mxu0 0.0
    %1380 = vmatpush2.msra.mxu0 0.0
    %1381 = vmatprep.subr.mxu0 0.0
    %1382 = vmatpush2.msra.mxu0 0.0
    %1383 = vmatprep.subr.mxu0 0.0
    %1384 = vmatpush2.msra.mxu0 0.0
    %1385 = vmatprep.subr.mxu0 0.0
    %1386 = vmatpush2.msra.mxu0 0.0
    %1387 = vmatprep.subr.mxu0 0.0
    %1388 = vmatpush2.msra.mxu0 0.0
    %1389 = vmatprep.subr.mxu0 0.0
    %1390 = vmatpush2.msra.mxu0 0.0
    %1391 = vmatprep.subr.mxu0 0.0
    %1392 = vmatpush2.msra.mxu0 0.0
    %1393 = vmatprep.subr.mxu0 0.0
    %1394 = vmatpush2.msra.mxu0 0.0
    %1395 = vmatprep.subr.mxu0 0.0
    %1396 = vmatpush2.msra.mxu0 0.0
    %1397 = vmatprep.subr.mxu0 0.0
    %1398 = vmatpush2.msra.mxu0 0.0
    %1399 = vmatprep.mubr.f32.mxu0 0.0
    %1400 = vmatmul.mubr.f32.gmra.mxu0 %v1329
    %v1401 = vpop.f32.mrf.mxu0
    %v1402 = vadd.f32 0.0, %v1401
    %v1403 = vpop.f32.mrf.mxu0
    %1404 = vdwg.mxu0
    %v1406 = vsel %vm818, %v1324, 0
    %1408 = vmatprep.subr.mxu0 0.0
    %1409 = vmatpush1.msra.mxu0 0.0
    %1410 = vmatprep.subr.mxu0 0.0
    %1411 = vmatpush1.msra.mxu0 0.0
    %1412 = vmatprep.subr.mxu0 0.0
    %1413 = vmatpush1.msra.mxu0 0.0
    %1414 = vmatprep.subr.mxu0 0.0
    %1415 = vmatpush1.msra.mxu0 0.0
    %1416 = vmatprep.subr.mxu0 0.0
    %1417 = vmatpush1.msra.mxu0 0.0
    %1418 = vmatprep.subr.mxu0 0.0
    %1419 = vmatpush1.msra.mxu0 0.0
    %1420 = vmatprep.subr.mxu0 0.0
    %1421 = vmatpush1.msra.mxu0 0.0
    %1422 = vmatprep.subr.mxu0 0.0
    %1423 = vmatpush1.msra.mxu0 0.0
    %1424 = vmatprep.subr.mxu0 0.0
    %1425 = vmatpush1.msra.mxu0 0.0
    %1426 = vmatprep.subr.mxu0 0.0
    %1427 = vmatpush1.msra.mxu0 0.0
    %1428 = vmatprep.subr.mxu0 0.0
    %1429 = vmatpush1.msra.mxu0 0.0
    %1430 = vmatprep.subr.mxu0 0.0
    %1431 = vmatpush1.msra.mxu0 0.0
    %1432 = vmatprep.subr.mxu0 0.0
    %1433 = vmatpush1.msra.mxu0 %v82
    %1434 = vmatprep.subr.mxu0 0.0
    %1435 = vmatpush1.msra.mxu0 %v81
    %1436 = vmatprep.subr.mxu0 0.0
    %1437 = vmatpush1.msra.mxu0 %v80
    %1438 = vmatprep.subr.mxu0 0.0
    %1439 = vmatpush1.msra.mxu0 %v79
    %1440 = vmatprep.subr.mxu0 0.0
    %1441 = vmatpush2.msra.mxu0 0.0
    %1442 = vmatprep.subr.mxu0 0.0
    %1443 = vmatpush2.msra.mxu0 0.0
    %1444 = vmatprep.subr.mxu0 0.0
    %1445 = vmatpush2.msra.mxu0 0.0
    %1446 = vmatprep.subr.mxu0 0.0
    %1447 = vmatpush2.msra.mxu0 0.0
    %1448 = vmatprep.subr.mxu0 0.0
    %1449 = vmatpush2.msra.mxu0 0.0
    %1450 = vmatprep.subr.mxu0 0.0
    %1451 = vmatpush2.msra.mxu0 0.0
    %1452 = vmatprep.subr.mxu0 0.0
    %1453 = vmatpush2.msra.mxu0 0.0
    %1454 = vmatprep.subr.mxu0 0.0
    %1455 = vmatpush2.msra.mxu0 0.0
    %1456 = vmatprep.subr.mxu0 0.0
    %1457 = vmatpush2.msra.mxu0 0.0
    %1458 = vmatprep.subr.mxu0 0.0
    %1459 = vmatpush2.msra.mxu0 0.0
    %1460 = vmatprep.subr.mxu0 0.0
    %1461 = vmatpush2.msra.mxu0 0.0
    %1462 = vmatprep.subr.mxu0 0.0
    %1463 = vmatpush2.msra.mxu0 0.0
    %1464 = vmatprep.subr.mxu0 0.0
    %1465 = vmatpush2.msra.mxu0 0.0
    %1466 = vmatprep.subr.mxu0 0.0
    %1467 = vmatpush2.msra.mxu0 0.0
    %1468 = vmatprep.subr.mxu0 0.0
    %1469 = vmatpush2.msra.mxu0 0.0
    %1470 = vmatprep.subr.mxu0 0.0
    %1471 = vmatpush2.msra.mxu0 0.0
    %1472 = vmatprep.mubr.f32.mxu0 0.0
    %1473 = vmatmul.mubr.f32.gmra.mxu0 %v1406
    %v1474 = vpop.f32.mrf.mxu0
    %v1475 = vadd.f32 %v1402, %v1474
    %v1476 = vpop.f32.mrf.mxu0
    %1477 = vdwg.mxu0
    %v1478 = vlaneseq
    %v1479 = vshrl.u32 %v1478, 7
    %v1480 = vsub.s32 0, %v1479
    %v1481 = vrot.slane %v86, %v1480
    %v1482 = vadd.f32 %v1475, %v1481
    %v1483 = vmax.f32 %v1482, 0.0
    %v1484 = vlaneseq
    %v1485 = vshrl.u32 %v1484, 7
    %v1486 = vsub.s32 0, %v1485
    %v1487 = vrot.slane %v87, %v1486
    %v1488 = vmul.f32 %v1483, %v1487
    %v1489 = vsel %vm818, %v1488, 0.0
    %1490 = vadd.xlane.f32.xlu0 %v1489
    %v1491 = vpop.xlane.xlu0 %1490
    %v1492 = vlaneseq
    %v1493 = vshrl.u32 %v1492, 7
    %v1494 = vsub.s32 0, %v1493
    %v1495 = vrot.slane %v88, %v1494
    %v1496 = vadd.f32 %v1491, %v1495
    %1498 = vset.pattern.permute.xlu0 0
    %1499 = vperm.xlu0 %1498, %v1496
    %v1500 = vpop.permute.xlu0 %1499
    %1502 = vst [vmem:[#allocation5] sm:$0xff] %v1500
    // Predicated region
    $region26: #{tpu_custom_call.1} parent=1 // pred_check
      _
    $region27: #{tpu_custom_call.1} parent=1 // pred_check_branch
      %1504 = sbr.rel (0) target = $region29
    $region28: #{tpu_custom_call.1} parent=1 // pred_region
      %s1506 = ssub.s32 128, 128
      %1507 = vsyncadd [#allocation4], %s1506
      %s1509 = sshll.u32 [#allocation5], 4
      %s1510 = int_to_ptr.vmem [resolvable:$true] %s1509
      %1512 = dma.vmem_to_hbm [thread:$0]  %s1510, 128, %s5, [#allocation4]
    $region29: #{tpu_custom_call.1} parent=1 // pred_fallthru
      _
    // Predicated region
    $region30: #{tpu_custom_call.1} parent=1 // pred_check
      _
    $region31: #{tpu_custom_call.1} parent=1 // pred_check_branch
      %1514 = sbr.rel (0) target = $region33
    $region32: #{tpu_custom_call.1} parent=1 // pred_region
      %1515 = dma.done [#allocation4], 128
    $region33: #{tpu_custom_call.1} parent=1 // pred_fallthru
      _
    %1516 = vsyncpa [#allocation3], 1
    %1517 = vsyncpa [#allocation4], 1

</llo_original>
